<compile_context>
chip_gen: v5e
topology: v5e:2x2
jax: 0.10.0
libtpu: 0.0.40
codegen_flags: <defaults>
</compile_context>

<pallas_src>
import jax
import jax.numpy as jnp
import numpy as np
from jax import lax
from jax.experimental import pallas as pl
from jax.experimental.pallas import tpu as pltpu


# ----------------------------------------------------------------------------
# Static network description
# ----------------------------------------------------------------------------
def make_meta(num_blocks, num_filters, num_classes, resolution):
    blocks = []
    in_planes = 3
    h = resolution
    for l in range(5):
        for i in range(num_blocks[l]):
            cout = num_filters[l][i]
            pool = (l < 4) and (i == num_blocks[l] - 1)  # max_pool2d after layers 1-4
            blocks.append(dict(H=h, W=h, Cin=in_planes, Cout=cout, pool=pool))
            in_planes = cout
        if l < 4:
            h //= 2
    out_res = resolution // (2 ** 4)
    return dict(
        blocks=blocks,
        H0=resolution, W0=resolution, C0=3,
        H5=out_res, W5=out_res, C5=in_planes,
        fc1_in=out_res * out_res * in_planes,
        fc1_out=num_filters[-1][0],
        num_classes=num_classes,
    )


def _round_up(x, m):
    return (x + m - 1) // m * m


# ----------------------------------------------------------------------------
# Parameter init (matches VGG._initialize_weights, eval-mode BN)
# ----------------------------------------------------------------------------
def init_vgg_params(key, meta):
    eps = 1e-5
    conv_blocks = []
    for blk in meta["blocks"]:
        cin, cout = blk["Cin"], blk["Cout"]
        key, k = jax.random.split(key)
        std = float(np.sqrt(2.0 / (cout * 3 * 3)))  # kaiming_normal_, fan_out, relu
        w_oihw = jax.random.normal(k, (cout, cin, 3, 3), jnp.float32) * std
        w_hwio = jnp.transpose(w_oihw, (2, 3, 1, 0))
        # BatchNorm2d(eval): gamma=1, beta=0, running mean=0, var=1.
        scale = jnp.full((cout,), 1.0 / np.sqrt(1.0 + eps), jnp.float32)
        shift = jnp.zeros((cout,), jnp.float32)  # identically zero for this init
        conv_blocks.append(dict(w_hwio=w_hwio, scale=scale, shift=shift))
    key, k1, k2 = jax.random.split(key, 3)
    fc1_w = jax.random.normal(k1, (meta["fc1_out"], meta["fc1_in"]), jnp.float32) * 0.01
    fc2_w = jax.random.normal(k2, (meta["num_classes"], meta["fc1_out"]), jnp.float32) * 0.01
    return dict(conv_blocks=conv_blocks,
                fc1_w=fc1_w, fc1_b=jnp.zeros((meta["fc1_out"],), jnp.float32),
                fc2_w=fc2_w, fc2_b=jnp.zeros((meta["num_classes"],), jnp.float32))


# ----------------------------------------------------------------------------
# Kernel-operand construction (all done once at init, outside the kernel)
# ----------------------------------------------------------------------------
def _banded_conv_mats(w_hwio, scale, W):
    """Expand a 3x3 HWIO kernel (BN scale folded) into 3 block-banded matrices.

    wm[dy][(w+dx-1)*Cin + ci, w*Cout + co] = w_hwio[dy, dx, ci, co] * scale[co]
    With rows = padded image rows stacked over the batch, the conv becomes
    acc += stacked_rows[dy : dy + M] @ wm[dy]; the width halo is simply omitted.
    TODO(synk): the banded expansion is O(W^2*Cin*Cout); for non-toy widths use
    per-tap (Cin,Cout) weights + lane rolls instead (v7x 64 MiB VMEM budget).
    """
    w = np.asarray(w_hwio, np.float32) * np.asarray(scale, np.float32)[None, None, None, :]
    cin, cout = w.shape[2], w.shape[3]
    wm = np.zeros((3, W * cin, W * cout), np.float32)
    for dy in range(3):
        for dx in range(3):
            for wc in range(W):
                wi = wc + dx - 1
                if 0 <= wi < W:
                    wm[dy, wi * cin:(wi + 1) * cin, wc * cout:(wc + 1) * cout] = w[dy, dx]
    return wm


def _pool_row_mats(H, TB):
    """Even/odd row-selection matrices (stacked) for 2x2 max-pool over the whole
    batch.  They simultaneously discard the cross-image garbage rows, pair rows
    with stride 2 and emit the NEXT block's padded layout (zero halo rows)."""
    S, H2 = H + 2, H // 2
    S2 = H2 + 2
    M = TB * S - 2
    rse = np.zeros((TB * S2, M), np.float32)
    rso = np.zeros((TB * S2, M), np.float32)
    for n in range(TB):
        for h2 in range(H2):
            rse[n * S2 + 1 + h2, n * S + 2 * h2] = 1.0
            rso[n * S2 + 1 + h2, n * S + 2 * h2 + 1] = 1.0
    return np.stack([rse, rso])


def _pool_col_mats(W, C):
    """Even/odd column selection+compaction matrices (stacked) for 2x2 max-pool."""
    W2 = W // 2
    cse = np.zeros((W * C, W2 * C), np.float32)
    cso = np.zeros((W * C, W2 * C), np.float32)
    eye = np.eye(C, dtype=np.float32)
    for w2 in range(W2):
        cse[(2 * w2) * C:(2 * w2 + 1) * C, w2 * C:(w2 + 1) * C] = eye
        cso[(2 * w2 + 1) * C:(2 * w2 + 2) * C, w2 * C:(w2 + 1) * C] = eye
    return np.stack([cse, cso])


def _repad_row_mat(H, TB):
    """Re-insert zero halo rows after a conv that is NOT followed by a pool and is
    not the last block (multi-block layers).  Unused by the demo config."""
    S = H + 2
    M = TB * S - 2
    p = np.zeros((TB * S, M), np.float32)
    for n in range(TB):
        for h in range(H):
            p[n * S + 1 + h, n * S + h] = 1.0
    return p


def _head_select_mat(H, TB):
    """g[h, n, :] selects the conv-output row of image n, image-row h."""
    S = H + 2
    M = TB * S - 2
    g = np.zeros((H, TB, M), np.float32)
    for n in range(TB):
        for h in range(H):
            g[h, n, n * S + h] = 1.0
    return g


def _permuted_fc1(fc1_w, H, W, C):
    """(out, C*H*W) torch Linear weight -> (H*W*C, out) matrix that consumes the
    kernel's (row=h, lane=w*C+c) activation layout (folds the NCHW flatten)."""
    w = np.asarray(fc1_w, np.float32)
    out_f = w.shape[0]
    eff = np.zeros((H * W * C, out_f), np.float32)
    for h in range(H):
        for wc in range(W):
            for c in range(C):
                eff[h * (W * C) + wc * C + c, :] = w[:, c * (H * W) + h * W + wc]
    return eff


def build_kernel_operands(params, meta, batch, mxu_dtype=jnp.float32):
    """All constant matmul operands, stored in the MXU input dtype."""
    nb = len(meta["blocks"])
    wmats, row_mats, col_mats, pad_mats = [], [], [], []
    for b, (blk, p) in enumerate(zip(meta["blocks"], params["conv_blocks"])):
        H, W, cout = blk["H"], blk["W"], blk["Cout"]
        wmats.append(jnp.asarray(_banded_conv_mats(p["w_hwio"], p["scale"], W), mxu_dtype))
        # TODO(synk): a nonzero BN shift (beta / running mean) would need a bias
        # add here; with this init it is exactly zero, so it is dropped entirely.
        if blk["pool"]:
            row_mats.append(jnp.asarray(_pool_row_mats(H, batch), mxu_dtype))
            col_mats.append(jnp.asarray(_pool_col_mats(W, cout), mxu_dtype))
        elif b < nb - 1:
            pad_mats.append(jnp.asarray(_repad_row_mat(H, batch), mxu_dtype))

    ncp = _round_up(meta["num_classes"], 128)           # lane-dense logits slab
    fc1_w_eff = _permuted_fc1(params["fc1_w"], meta["H5"], meta["W5"], meta["C5"])
    fc2_w_pad = np.zeros((meta["fc1_out"], ncp), np.float32)
    fc2_w_pad[:, :meta["num_classes"]] = np.asarray(params["fc2_w"], np.float32).T
    fc2_b_pad = np.zeros((1, ncp), np.float32)
    fc2_b_pad[0, :meta["num_classes"]] = np.asarray(params["fc2_b"], np.float32)

    return dict(
        wmats=wmats, row_mats=row_mats, col_mats=col_mats, pad_mats=pad_mats,
        g=jnp.asarray(_head_select_mat(meta["H5"], batch), mxu_dtype),
        fc1_w=jnp.asarray(fc1_w_eff, mxu_dtype),
        fc1_b=jnp.asarray(np.asarray(params["fc1_b"], np.float32).reshape(1, -1)),
        fc2_w=jnp.asarray(fc2_w_pad, mxu_dtype),
        fc2_b=jnp.asarray(fc2_b_pad),
        ncp=ncp, batch=batch, mxu_dtype=mxu_dtype,
    )


# ----------------------------------------------------------------------------
# The fused forward-pass kernel (whole batch in one step, batch folded into M)
# ----------------------------------------------------------------------------
def make_vgg_kernel(meta, batch, mxu_dtype):
    blocks = meta["blocks"]
    nb = len(blocks)
    npool = sum(1 for b in blocks if b["pool"])
    npad = sum(1 for i, b in enumerate(blocks) if (not b["pool"]) and i < nb - 1)
    H5, W5, C5 = meta["H5"], meta["W5"], meta["C5"]
    seg = W5 * C5
    f32 = jnp.float32
    TB = batch

    def kernel(*refs):
        i = 0
        x_ref = refs[i]; i += 1                     # (TB*(H0+2), W0*C0), halos padded
        wm_refs = refs[i:i + nb]; i += nb           # (3, W*Cin, W*Cout) each
        rp_refs = refs[i:i + npool]; i += npool     # (2, TB*S2, M)       each
        cp_refs = refs[i:i + npool]; i += npool     # (2, W*Cout, W2*Cout) each
        pd_refs = refs[i:i + npad]; i += npad       # (TB*S, M)           each
        g_ref = refs[i]; i += 1                     # (H5, TB, M5)
        fc1w_ref, fc1b_ref, fc2w_ref, fc2b_ref = refs[i:i + 4]; i += 4
        out_ref = refs[i]; i += 1                   # (TB, num_classes padded to 128)
        pbuf_refs = refs[i:]                        # inputs of blocks 2..nb (f32)

        pi = 0
        di = 0
        src = x_ref                                 # padded, batch-stacked input ref
        nxt = None
        for b, blk in enumerate(blocks):
            H, W, Cout = blk["H"], blk["W"], blk["Cout"]
            S = H + 2
            M = TB * S - 2
            wm = wm_refs[b]
            acc = jnp.zeros((M, W * Cout), f32)
            for dy in range(3):                     # 3 banded matmuls, M = batch*rows
                acc = acc + jnp.dot(src[pl.ds(dy, M), :].astype(mxu_dtype), wm[dy],
                                    preferred_element_type=f32)
            y = jnp.maximum(acc, 0.0)               # BN shift == 0 (folded scale in wm)
            if blk["pool"]:                         # fused 2x2 max-pool + re-padding
                rp = rp_refs[pi]; cp = cp_refs[pi]; pi += 1
                ye = y.astype(mxu_dtype)
                rm = jnp.maximum(
                    jnp.dot(rp[0], ye, preferred_element_type=f32),
                    jnp.dot(rp[1], ye, preferred_element_type=f32))
                rme = rm.astype(mxu_dtype)
                nxt = jnp.maximum(
                    jnp.dot(rme, cp[0], preferred_element_type=f32),
                    jnp.dot(rme, cp[1], preferred_element_type=f32))
            elif b < nb - 1:                        # mid-layer block without pooling
                nxt = jnp.dot(pd_refs[di][...], y.astype(mxu_dtype),
                              preferred_element_type=f32)
                di += 1
            else:
                nxt = y                             # last block feeds the classifier
            if b < nb - 1:
                pbuf_refs[b][...] = nxt             # written exactly once, halos inside
                src = pbuf_refs[b]

        # Classifier head (is_vgg19 branch): fc2(relu(fc1(flatten))), batch in M.
        fc1w = fc1w_ref[...]
        y1 = jnp.zeros((TB, fc1w.shape[-1]), f32)
        for h in range(H5):                         # H5 == 1 here -> single contraction
            feats = jnp.dot(g_ref[h], nxt.astype(mxu_dtype),
                            preferred_element_type=f32)          # (TB, W5*C5)
            y1 = y1 + jnp.dot(feats.astype(mxu_dtype),
                              fc1w[h * seg:(h + 1) * seg, :],
                              preferred_element_type=f32)
        y1 = jnp.maximum(y1 + fc1b_ref[...], 0.0)
        y2 = jnp.dot(y1.astype(mxu_dtype), fc2w_ref[...],
                     preferred_element_type=f32) + fc2b_ref[...]
        out_ref[...] = y2.astype(out_ref.dtype)     # lane-dense (TB, 128) store

    return kernel


def vgg_forward(x_nchw, kops, meta):
    N, C0, H0, W0 = x_nchw.shape
    assert (C0, H0, W0) == (meta["C0"], meta["H0"], meta["W0"])
    assert N == kops["batch"], "kernel operands were built for a fixed batch size"
    ncp = kops["ncp"]
    S0 = H0 + 2

    # Single cheap boundary transform: NCHW -> batch-stacked rows with the conv
    # halo rows already zero-padded (layout plumbing, done once outside the kernel).
    xr = jnp.transpose(x_nchw, (0, 2, 3, 1)).reshape(N, H0, W0 * C0)
    xp = jnp.pad(xr, ((0, 0), (1, 1), (0, 0))).reshape(N * S0, W0 * C0)

    inputs = ([xp] + kops["wmats"] + kops["row_mats"] + kops["col_mats"]
              + kops["pad_mats"] + [kops["g"], kops["fc1_w"], kops["fc1_b"],
                                    kops["fc2_w"], kops["fc2_b"]])
    in_specs = [pl.BlockSpec(p.shape, lambda i, nd=p.ndim: (0,) * nd) for p in inputs]

    # VMEM scratch: the (batch-stacked, halo-padded) input of blocks 2..nb.
    scratch = [pltpu.VMEM((N * (blk["H"] + 2), blk["W"] * blk["Cin"]), jnp.float32)
               for blk in meta["blocks"][1:]]

    # Whole batch in one grid step (batch is folded into the matmul M dimension).
    # TODO(synk): for large batches, tile the batch over the grid in multiples
    # that keep the row block a multiple of 8 and mark the axis "parallel".
    out = pl.pallas_call(
        make_vgg_kernel(meta, N, kops["mxu_dtype"]),
        out_shape=jax.ShapeDtypeStruct((N, ncp), jnp.float32),
        grid=(1,),
        in_specs=in_specs,
        out_specs=pl.BlockSpec((N, ncp), lambda i: (0, 0)),
        scratch_shapes=scratch,
        compiler_params=pltpu.CompilerParams(dimension_semantics=("arbitrary",)),
    )(*inputs)
    return out[:, :meta["num_classes"]]


# ----------------------------------------------------------------------------
# Pure-JAX reference (matches torch semantics) for sanity checking
# ----------------------------------------------------------------------------
def vgg_forward_ref(x_nchw, params, meta):
    x = jnp.transpose(x_nchw, (0, 2, 3, 1))
    for blk, p in zip(meta["blocks"], params["conv_blocks"]):
        x = lax.conv_general_dilated(x, p["w_hwio"], (1, 1), "SAME",
                                     dimension_numbers=("NHWC", "HWIO", "NHWC"))
        x = jnp.maximum(x * p["scale"].reshape(1, 1, 1, -1)
                        + p["shift"].reshape(1, 1, 1, -1), 0.0)
        if blk["pool"]:
            n, h, w, c = x.shape
            x = x.reshape(n, h // 2, 2, w // 2, 2, c).max(axis=(2, 4))
    n = x.shape[0]
    x = jnp.transpose(x, (0, 3, 1, 2)).reshape(n, -1)   # torch out.view(N, -1)
    x = jnp.maximum(x @ params["fc1_w"].T + params["fc1_b"], 0.0)
    x = x @ params["fc2_w"].T + params["fc2_b"]
    return x


# ----------------------------------------------------------------------------
if __name__ == "__main__":
    # Small VGG config (len(num_filters[2]) == 4 -> is_vgg19 classifier path).
    num_blocks = [1, 1, 1, 1, 1]
    num_filters = [[8], [16], [16, 16, 16, 16], [32], [32], [64]]
    num_classes = 10
    resolution = 16
    batch = 2

    meta = make_meta(num_blocks, num_filters, num_classes, resolution)

    key = jax.random.PRNGKey(0)
    key, kx = jax.random.split(key)
    x = jax.random.normal(kx, (batch, 3, resolution, resolution), jnp.float32)  # NCHW

    params = init_vgg_params(key, meta)
    ref = jax.block_until_ready(vgg_forward_ref(x, params, meta))

    # f32 MXU path (exact vs. reference).
    kops_f32 = build_kernel_operands(params, meta, batch, mxu_dtype=jnp.float32)
    out_f32 = jax.block_until_ready(vgg_forward(x, kops_f32, meta))
    assert out_f32.shape == (batch, num_classes), out_f32.shape
    np.testing.assert_allclose(np.asarray(out_f32), np.asarray(ref), rtol=5e-2, atol=2e-3)

    # bf16 MXU-input path (v6e / v7x friendly): weights stored bf16, LHS cast at
    # each dot, accumulation stays f32.
    kops_bf16 = build_kernel_operands(params, meta, batch, mxu_dtype=jnp.bfloat16)
    out_bf16 = jax.block_until_ready(vgg_forward(x, kops_bf16, meta))
    np.testing.assert_allclose(np.asarray(out_bf16), np.asarray(ref), rtol=1e-1, atol=5e-3)

    print("KERNEL_OK")
</pallas_src>

<mosaic_0001>
module attributes {stable_mosaic.version = 11 : i64} {
  func.func @kernel(%arg0: i32, %arg1: memref<36x48xf32, #tpu.memory_space<vmem>>, %arg2: memref<3x48x128xf32, #tpu.memory_space<vmem>>, %arg3: memref<3x64x128xf32, #tpu.memory_space<vmem>>, %arg4: memref<3x64x64xf32, #tpu.memory_space<vmem>>, %arg5: memref<3x32x64xf32, #tpu.memory_space<vmem>>, %arg6: memref<3x32x32xf32, #tpu.memory_space<vmem>>, %arg7: memref<2x20x34xf32, #tpu.memory_space<vmem>>, %arg8: memref<2x12x18xf32, #tpu.memory_space<vmem>>, %arg9: memref<2x8x10xf32, #tpu.memory_space<vmem>>, %arg10: memref<2x6x6xf32, #tpu.memory_space<vmem>>, %arg11: memref<2x128x64xf32, #tpu.memory_space<vmem>>, %arg12: memref<2x128x64xf32, #tpu.memory_space<vmem>>, %arg13: memref<2x64x32xf32, #tpu.memory_space<vmem>>, %arg14: memref<2x64x32xf32, #tpu.memory_space<vmem>>, %arg15: memref<1x2x4xf32, #tpu.memory_space<vmem>>, %arg16: memref<32x64xf32, #tpu.memory_space<vmem>>, %arg17: memref<1x64xf32, #tpu.memory_space<vmem>>, %arg18: memref<64x128xf32, #tpu.memory_space<vmem>>, %arg19: memref<1x128xf32, #tpu.memory_space<vmem>>, %arg20: memref<2x128xf32, #tpu.memory_space<vmem>>, %arg21: memref<20x64xf32, #tpu.memory_space<vmem>>, %arg22: memref<12x64xf32, #tpu.memory_space<vmem>>, %arg23: memref<8x32xf32, #tpu.memory_space<vmem>>, %arg24: memref<6x32xf32, #tpu.memory_space<vmem>>) attributes {dimension_semantics = [#tpu.dimension_semantics<arbitrary>], iteration_bounds = array<i64: 1>, scalar_prefetch = 0 : i64, scratch_operands = 4 : i64, tpu.core_type = #tpu.core_type<tc>, window_params = [{pipeline_mode = #tpu.pipeline_mode<synchronous>, transform_indices = @transform_0, window_bounds = array<i64: 36, 48>}, {pipeline_mode = #tpu.pipeline_mode<synchronous>, transform_indices = @transform_1, window_bounds = array<i64: 3, 48, 128>}, {pipeline_mode = #tpu.pipeline_mode<synchronous>, transform_indices = @transform_2, window_bounds = array<i64: 3, 64, 128>}, {pipeline_mode = #tpu.pipeline_mode<synchronous>, transform_indices = @transform_3, window_bounds = array<i64: 3, 64, 64>}, {pipeline_mode = #tpu.pipeline_mode<synchronous>, transform_indices = @transform_4, window_bounds = array<i64: 3, 32, 64>}, {pipeline_mode = #tpu.pipeline_mode<synchronous>, transform_indices = @transform_5, window_bounds = array<i64: 3, 32, 32>}, {pipeline_mode = #tpu.pipeline_mode<synchronous>, transform_indices = @transform_6, window_bounds = array<i64: 2, 20, 34>}, {pipeline_mode = #tpu.pipeline_mode<synchronous>, transform_indices = @transform_7, window_bounds = array<i64: 2, 12, 18>}, {pipeline_mode = #tpu.pipeline_mode<synchronous>, transform_indices = @transform_8, window_bounds = array<i64: 2, 8, 10>}, {pipeline_mode = #tpu.pipeline_mode<synchronous>, transform_indices = @transform_9, window_bounds = array<i64: 2, 6, 6>}, {pipeline_mode = #tpu.pipeline_mode<synchronous>, transform_indices = @transform_10, window_bounds = array<i64: 2, 128, 64>}, {pipeline_mode = #tpu.pipeline_mode<synchronous>, transform_indices = @transform_11, window_bounds = array<i64: 2, 128, 64>}, {pipeline_mode = #tpu.pipeline_mode<synchronous>, transform_indices = @transform_12, window_bounds = array<i64: 2, 64, 32>}, {pipeline_mode = #tpu.pipeline_mode<synchronous>, transform_indices = @transform_13, window_bounds = array<i64: 2, 64, 32>}, {pipeline_mode = #tpu.pipeline_mode<synchronous>, transform_indices = @transform_14, window_bounds = array<i64: 1, 2, 4>}, {pipeline_mode = #tpu.pipeline_mode<synchronous>, transform_indices = @transform_15, window_bounds = array<i64: 32, 64>}, {pipeline_mode = #tpu.pipeline_mode<synchronous>, transform_indices = @transform_16, window_bounds = array<i64: 1, 64>}, {pipeline_mode = #tpu.pipeline_mode<synchronous>, transform_indices = @transform_17, window_bounds = array<i64: 64, 128>}, {pipeline_mode = #tpu.pipeline_mode<synchronous>, transform_indices = @transform_18, window_bounds = array<i64: 1, 128>}, {pipeline_mode = #tpu.pipeline_mode<synchronous>, transform_indices = @transform_19, window_bounds = array<i64: 2, 128>}]} {
    %cst = arith.constant 0.000000e+00 : f32
    %0 = vector.broadcast %cst : f32 to vector<34x128xf32>
    %c0 = arith.constant 0 : index
    %c0_0 = arith.constant 0 : index
    %1 = vector.load %arg1[%c0, %c0_0] : memref<36x48xf32, #tpu.memory_space<vmem>>, vector<34x48xf32>
    %c0_1 = arith.constant 0 : index
    %c0_2 = arith.constant 0 : index
    %c0_3 = arith.constant 0 : index
    %2 = vector.load %arg2[%c0_1, %c0_2, %c0_3] : memref<3x48x128xf32, #tpu.memory_space<vmem>>, vector<1x48x128xf32>
    %3 = vector.shape_cast %2 : vector<1x48x128xf32> to vector<48x128xf32>
    %cst_4 = arith.constant dense<0.000000e+00> : vector<34x128xf32>
    %4 = tpu.matmul %1, %3, %cst_4 {dimension_numbers = #tpu.dot_dimension_numbers<[1], [0], [0], [1], [0, 0, 1, 1], [], []>} : vector<34x48xf32>, vector<48x128xf32>, vector<34x128xf32> -> vector<34x128xf32>
    %5 = arith.addf %0, %4 : vector<34x128xf32>
    %c1 = arith.constant 1 : index
    %c0_5 = arith.constant 0 : index
    %6 = vector.load %arg1[%c1, %c0_5] : memref<36x48xf32, #tpu.memory_space<vmem>>, vector<34x48xf32>
    %c1_6 = arith.constant 1 : index
    %c0_7 = arith.constant 0 : index
    %c0_8 = arith.constant 0 : index
    %7 = vector.load %arg2[%c1_6, %c0_7, %c0_8] : memref<3x48x128xf32, #tpu.memory_space<vmem>>, vector<1x48x128xf32>
    %8 = vector.shape_cast %7 : vector<1x48x128xf32> to vector<48x128xf32>
    %cst_9 = arith.constant dense<0.000000e+00> : vector<34x128xf32>
    %9 = tpu.matmul %6, %8, %cst_9 {dimension_numbers = #tpu.dot_dimension_numbers<[1], [0], [0], [1], [0, 0, 1, 1], [], []>} : vector<34x48xf32>, vector<48x128xf32>, vector<34x128xf32> -> vector<34x128xf32>
    %10 = arith.addf %5, %9 : vector<34x128xf32>
    %c2 = arith.constant 2 : index
    %c0_10 = arith.constant 0 : index
    %11 = vector.load %arg1[%c2, %c0_10] : memref<36x48xf32, #tpu.memory_space<vmem>>, vector<34x48xf32>
    %c2_11 = arith.constant 2 : index
    %c0_12 = arith.constant 0 : index
    %c0_13 = arith.constant 0 : index
    %12 = vector.load %arg2[%c2_11, %c0_12, %c0_13] : memref<3x48x128xf32, #tpu.memory_space<vmem>>, vector<1x48x128xf32>
    %13 = vector.shape_cast %12 : vector<1x48x128xf32> to vector<48x128xf32>
    %cst_14 = arith.constant dense<0.000000e+00> : vector<34x128xf32>
    %14 = tpu.matmul %11, %13, %cst_14 {dimension_numbers = #tpu.dot_dimension_numbers<[1], [0], [0], [1], [0, 0, 1, 1], [], []>} : vector<34x48xf32>, vector<48x128xf32>, vector<34x128xf32> -> vector<34x128xf32>
    %15 = arith.addf %10, %14 : vector<34x128xf32>
    %cst_15 = arith.constant 0.000000e+00 : f32
    %16 = vector.broadcast %cst_15 : f32 to vector<34x128xf32>
    %17 = arith.maximumf %15, %16 : vector<34x128xf32>
    %c0_16 = arith.constant 0 : index
    %c0_17 = arith.constant 0 : index
    %c0_18 = arith.constant 0 : index
    %18 = vector.load %arg7[%c0_16, %c0_17, %c0_18] : memref<2x20x34xf32, #tpu.memory_space<vmem>>, vector<1x20x34xf32>
    %19 = vector.shape_cast %18 : vector<1x20x34xf32> to vector<20x34xf32>
    %cst_19 = arith.constant dense<0.000000e+00> : vector<20x128xf32>
    %20 = tpu.matmul %19, %17, %cst_19 {dimension_numbers = #tpu.dot_dimension_numbers<[1], [0], [0], [1], [0, 0, 1, 1], [], []>} : vector<20x34xf32>, vector<34x128xf32>, vector<20x128xf32> -> vector<20x128xf32>
    %c1_20 = arith.constant 1 : index
    %c0_21 = arith.constant 0 : index
    %c0_22 = arith.constant 0 : index
    %21 = vector.load %arg7[%c1_20, %c0_21, %c0_22] : memref<2x20x34xf32, #tpu.memory_space<vmem>>, vector<1x20x34xf32>
    %22 = vector.shape_cast %21 : vector<1x20x34xf32> to vector<20x34xf32>
    %cst_23 = arith.constant dense<0.000000e+00> : vector<20x128xf32>
    %23 = tpu.matmul %22, %17, %cst_23 {dimension_numbers = #tpu.dot_dimension_numbers<[1], [0], [0], [1], [0, 0, 1, 1], [], []>} : vector<20x34xf32>, vector<34x128xf32>, vector<20x128xf32> -> vector<20x128xf32>
    %24 = arith.maximumf %20, %23 : vector<20x128xf32>
    %c0_24 = arith.constant 0 : index
    %c0_25 = arith.constant 0 : index
    %c0_26 = arith.constant 0 : index
    %25 = vector.load %arg11[%c0_24, %c0_25, %c0_26] : memref<2x128x64xf32, #tpu.memory_space<vmem>>, vector<1x128x64xf32>
    %26 = vector.shape_cast %25 : vector<1x128x64xf32> to vector<128x64xf32>
    %cst_27 = arith.constant dense<0.000000e+00> : vector<20x64xf32>
    %27 = tpu.matmul %24, %26, %cst_27 {dimension_numbers = #tpu.dot_dimension_numbers<[1], [0], [0], [1], [0, 0, 1, 1], [], []>} : vector<20x128xf32>, vector<128x64xf32>, vector<20x64xf32> -> vector<20x64xf32>
    %c1_28 = arith.constant 1 : index
    %c0_29 = arith.constant 0 : index
    %c0_30 = arith.constant 0 : index
    %28 = vector.load %arg11[%c1_28, %c0_29, %c0_30] : memref<2x128x64xf32, #tpu.memory_space<vmem>>, vector<1x128x64xf32>
    %29 = vector.shape_cast %28 : vector<1x128x64xf32> to vector<128x64xf32>
    %cst_31 = arith.constant dense<0.000000e+00> : vector<20x64xf32>
    %30 = tpu.matmul %24, %29, %cst_31 {dimension_numbers = #tpu.dot_dimension_numbers<[1], [0], [0], [1], [0, 0, 1, 1], [], []>} : vector<20x128xf32>, vector<128x64xf32>, vector<20x64xf32> -> vector<20x64xf32>
    %31 = arith.maximumf %27, %30 : vector<20x64xf32>
    %c0_32 = arith.constant 0 : index
    %c0_33 = arith.constant 0 : index
    %32 = vector.load %arg21[%c0_32, %c0_33] : memref<20x64xf32, #tpu.memory_space<vmem>>, vector<20x64xf32>
    tpu.vector_store %arg21[%c0_32, %c0_33], %31 {strides = array<i32>} : memref<20x64xf32, #tpu.memory_space<vmem>>, vector<20x64xf32>,
    %cst_34 = arith.constant 0.000000e+00 : f32
    %33 = vector.broadcast %cst_34 : f32 to vector<18x128xf32>
    %c0_35 = arith.constant 0 : index
    %c0_36 = arith.constant 0 : index
    %34 = vector.load %arg21[%c0_35, %c0_36] : memref<20x64xf32, #tpu.memory_space<vmem>>, vector<18x64xf32>
    %c0_37 = arith.constant 0 : index
    %c0_38 = arith.constant 0 : index
    %c0_39 = arith.constant 0 : index
    %35 = vector.load %arg3[%c0_37, %c0_38, %c0_39] : memref<3x64x128xf32, #tpu.memory_space<vmem>>, vector<1x64x128xf32>
    %36 = vector.shape_cast %35 : vector<1x64x128xf32> to vector<64x128xf32>
    %cst_40 = arith.constant dense<0.000000e+00> : vector<18x128xf32>
    %37 = tpu.matmul %34, %36, %cst_40 {dimension_numbers = #tpu.dot_dimension_numbers<[1], [0], [0], [1], [0, 0, 1, 1], [], []>} : vector<18x64xf32>, vector<64x128xf32>, vector<18x128xf32> -> vector<18x128xf32>
    %38 = arith.addf %33, %37 : vector<18x128xf32>
    %c1_41 = arith.constant 1 : index
    %c0_42 = arith.constant 0 : index
    %39 = vector.load %arg21[%c1_41, %c0_42] : memref<20x64xf32, #tpu.memory_space<vmem>>, vector<18x64xf32>
    %c1_43 = arith.constant 1 : index
    %c0_44 = arith.constant 0 : index
    %c0_45 = arith.constant 0 : index
    %40 = vector.load %arg3[%c1_43, %c0_44, %c0_45] : memref<3x64x128xf32, #tpu.memory_space<vmem>>, vector<1x64x128xf32>
    %41 = vector.shape_cast %40 : vector<1x64x128xf32> to vector<64x128xf32>
    %cst_46 = arith.constant dense<0.000000e+00> : vector<18x128xf32>
    %42 = tpu.matmul %39, %41, %cst_46 {dimension_numbers = #tpu.dot_dimension_numbers<[1], [0], [0], [1], [0, 0, 1, 1], [], []>} : vector<18x64xf32>, vector<64x128xf32>, vector<18x128xf32> -> vector<18x128xf32>
    %43 = arith.addf %38, %42 : vector<18x128xf32>
    %c2_47 = arith.constant 2 : index
    %c0_48 = arith.constant 0 : index
    %44 = vector.load %arg21[%c2_47, %c0_48] : memref<20x64xf32, #tpu.memory_space<vmem>>, vector<18x64xf32>
    %c2_49 = arith.constant 2 : index
    %c0_50 = arith.constant 0 : index
    %c0_51 = arith.constant 0 : index
    %45 = vector.load %arg3[%c2_49, %c0_50, %c0_51] : memref<3x64x128xf32, #tpu.memory_space<vmem>>, vector<1x64x128xf32>
    %46 = vector.shape_cast %45 : vector<1x64x128xf32> to vector<64x128xf32>
    %cst_52 = arith.constant dense<0.000000e+00> : vector<18x128xf32>
    %47 = tpu.matmul %44, %46, %cst_52 {dimension_numbers = #tpu.dot_dimension_numbers<[1], [0], [0], [1], [0, 0, 1, 1], [], []>} : vector<18x64xf32>, vector<64x128xf32>, vector<18x128xf32> -> vector<18x128xf32>
    %48 = arith.addf %43, %47 : vector<18x128xf32>
    %cst_53 = arith.constant 0.000000e+00 : f32
    %49 = vector.broadcast %cst_53 : f32 to vector<18x128xf32>
    %50 = arith.maximumf %48, %49 : vector<18x128xf32>
    %c0_54 = arith.constant 0 : index
    %c0_55 = arith.constant 0 : index
    %c0_56 = arith.constant 0 : index
    %51 = vector.load %arg8[%c0_54, %c0_55, %c0_56] : memref<2x12x18xf32, #tpu.memory_space<vmem>>, vector<1x12x18xf32>
    %52 = vector.shape_cast %51 : vector<1x12x18xf32> to vector<12x18xf32>
    %cst_57 = arith.constant dense<0.000000e+00> : vector<12x128xf32>
    %53 = tpu.matmul %52, %50, %cst_57 {dimension_numbers = #tpu.dot_dimension_numbers<[1], [0], [0], [1], [0, 0, 1, 1], [], []>} : vector<12x18xf32>, vector<18x128xf32>, vector<12x128xf32> -> vector<12x128xf32>
    %c1_58 = arith.constant 1 : index
    %c0_59 = arith.constant 0 : index
    %c0_60 = arith.constant 0 : index
    %54 = vector.load %arg8[%c1_58, %c0_59, %c0_60] : memref<2x12x18xf32, #tpu.memory_space<vmem>>, vector<1x12x18xf32>
    %55 = vector.shape_cast %54 : vector<1x12x18xf32> to vector<12x18xf32>
    %cst_61 = arith.constant dense<0.000000e+00> : vector<12x128xf32>
    %56 = tpu.matmul %55, %50, %cst_61 {dimension_numbers = #tpu.dot_dimension_numbers<[1], [0], [0], [1], [0, 0, 1, 1], [], []>} : vector<12x18xf32>, vector<18x128xf32>, vector<12x128xf32> -> vector<12x128xf32>
    %57 = arith.maximumf %53, %56 : vector<12x128xf32>
    %c0_62 = arith.constant 0 : index
    %c0_63 = arith.constant 0 : index
    %c0_64 = arith.constant 0 : index
    %58 = vector.load %arg12[%c0_62, %c0_63, %c0_64] : memref<2x128x64xf32, #tpu.memory_space<vmem>>, vector<1x128x64xf32>
    %59 = vector.shape_cast %58 : vector<1x128x64xf32> to vector<128x64xf32>
    %cst_65 = arith.constant dense<0.000000e+00> : vector<12x64xf32>
    %60 = tpu.matmul %57, %59, %cst_65 {dimension_numbers = #tpu.dot_dimension_numbers<[1], [0], [0], [1], [0, 0, 1, 1], [], []>} : vector<12x128xf32>, vector<128x64xf32>, vector<12x64xf32> -> vector<12x64xf32>
    %c1_66 = arith.constant 1 : index
    %c0_67 = arith.constant 0 : index
    %c0_68 = arith.constant 0 : index
    %61 = vector.load %arg12[%c1_66, %c0_67, %c0_68] : memref<2x128x64xf32, #tpu.memory_space<vmem>>, vector<1x128x64xf32>
    %62 = vector.shape_cast %61 : vector<1x128x64xf32> to vector<128x64xf32>
    %cst_69 = arith.constant dense<0.000000e+00> : vector<12x64xf32>
    %63 = tpu.matmul %57, %62, %cst_69 {dimension_numbers = #tpu.dot_dimension_numbers<[1], [0], [0], [1], [0, 0, 1, 1], [], []>} : vector<12x128xf32>, vector<128x64xf32>, vector<12x64xf32> -> vector<12x64xf32>
    %64 = arith.maximumf %60, %63 : vector<12x64xf32>
    %c0_70 = arith.constant 0 : index
    %c0_71 = arith.constant 0 : index
    %65 = vector.load %arg22[%c0_70, %c0_71] : memref<12x64xf32, #tpu.memory_space<vmem>>, vector<12x64xf32>
    tpu.vector_store %arg22[%c0_70, %c0_71], %64 {strides = array<i32>} : memref<12x64xf32, #tpu.memory_space<vmem>>, vector<12x64xf32>,
    %cst_72 = arith.constant 0.000000e+00 : f32
    %66 = vector.broadcast %cst_72 : f32 to vector<10x64xf32>
    %c0_73 = arith.constant 0 : index
    %c0_74 = arith.constant 0 : index
    %67 = vector.load %arg22[%c0_73, %c0_74] : memref<12x64xf32, #tpu.memory_space<vmem>>, vector<10x64xf32>
    %c0_75 = arith.constant 0 : index
    %c0_76 = arith.constant 0 : index
    %c0_77 = arith.constant 0 : index
    %68 = vector.load %arg4[%c0_75, %c0_76, %c0_77] : memref<3x64x64xf32, #tpu.memory_space<vmem>>, vector<1x64x64xf32>
    %69 = vector.shape_cast %68 : vector<1x64x64xf32> to vector<64x64xf32>
    %cst_78 = arith.constant dense<0.000000e+00> : vector<10x64xf32>
    %70 = tpu.matmul %67, %69, %cst_78 {dimension_numbers = #tpu.dot_dimension_numbers<[1], [0], [0], [1], [0, 0, 1, 1], [], []>} : vector<10x64xf32>, vector<64x64xf32>, vector<10x64xf32> -> vector<10x64xf32>
    %71 = arith.addf %66, %70 : vector<10x64xf32>
    %c1_79 = arith.constant 1 : index
    %c0_80 = arith.constant 0 : index
    %72 = vector.load %arg22[%c1_79, %c0_80] : memref<12x64xf32, #tpu.memory_space<vmem>>, vector<10x64xf32>
    %c1_81 = arith.constant 1 : index
    %c0_82 = arith.constant 0 : index
    %c0_83 = arith.constant 0 : index
    %73 = vector.load %arg4[%c1_81, %c0_82, %c0_83] : memref<3x64x64xf32, #tpu.memory_space<vmem>>, vector<1x64x64xf32>
    %74 = vector.shape_cast %73 : vector<1x64x64xf32> to vector<64x64xf32>
    %cst_84 = arith.constant dense<0.000000e+00> : vector<10x64xf32>
    %75 = tpu.matmul %72, %74, %cst_84 {dimension_numbers = #tpu.dot_dimension_numbers<[1], [0], [0], [1], [0, 0, 1, 1], [], []>} : vector<10x64xf32>, vector<64x64xf32>, vector<10x64xf32> -> vector<10x64xf32>
    %76 = arith.addf %71, %75 : vector<10x64xf32>
    %c2_85 = arith.constant 2 : index
    %c0_86 = arith.constant 0 : index
    %77 = vector.load %arg22[%c2_85, %c0_86] : memref<12x64xf32, #tpu.memory_space<vmem>>, vector<10x64xf32>
    %c2_87 = arith.constant 2 : index
    %c0_88 = arith.constant 0 : index
    %c0_89 = arith.constant 0 : index
    %78 = vector.load %arg4[%c2_87, %c0_88, %c0_89] : memref<3x64x64xf32, #tpu.memory_space<vmem>>, vector<1x64x64xf32>
    %79 = vector.shape_cast %78 : vector<1x64x64xf32> to vector<64x64xf32>
    %cst_90 = arith.constant dense<0.000000e+00> : vector<10x64xf32>
    %80 = tpu.matmul %77, %79, %cst_90 {dimension_numbers = #tpu.dot_dimension_numbers<[1], [0], [0], [1], [0, 0, 1, 1], [], []>} : vector<10x64xf32>, vector<64x64xf32>, vector<10x64xf32> -> vector<10x64xf32>
    %81 = arith.addf %76, %80 : vector<10x64xf32>
    %cst_91 = arith.constant 0.000000e+00 : f32
    %82 = vector.broadcast %cst_91 : f32 to vector<10x64xf32>
    %83 = arith.maximumf %81, %82 : vector<10x64xf32>
    %c0_92 = arith.constant 0 : index
    %c0_93 = arith.constant 0 : index
    %c0_94 = arith.constant 0 : index
    %84 = vector.load %arg9[%c0_92, %c0_93, %c0_94] : memref<2x8x10xf32, #tpu.memory_space<vmem>>, vector<1x8x10xf32>
    %85 = vector.shape_cast %84 : vector<1x8x10xf32> to vector<8x10xf32>
    %cst_95 = arith.constant dense<0.000000e+00> : vector<8x64xf32>
    %86 = tpu.matmul %85, %83, %cst_95 {dimension_numbers = #tpu.dot_dimension_numbers<[1], [0], [0], [1], [0, 0, 1, 1], [], []>} : vector<8x10xf32>, vector<10x64xf32>, vector<8x64xf32> -> vector<8x64xf32>
    %c1_96 = arith.constant 1 : index
    %c0_97 = arith.constant 0 : index
    %c0_98 = arith.constant 0 : index
    %87 = vector.load %arg9[%c1_96, %c0_97, %c0_98] : memref<2x8x10xf32, #tpu.memory_space<vmem>>, vector<1x8x10xf32>
    %88 = vector.shape_cast %87 : vector<1x8x10xf32> to vector<8x10xf32>
    %cst_99 = arith.constant dense<0.000000e+00> : vector<8x64xf32>
    %89 = tpu.matmul %88, %83, %cst_99 {dimension_numbers = #tpu.dot_dimension_numbers<[1], [0], [0], [1], [0, 0, 1, 1], [], []>} : vector<8x10xf32>, vector<10x64xf32>, vector<8x64xf32> -> vector<8x64xf32>
    %90 = arith.maximumf %86, %89 : vector<8x64xf32>
    %c0_100 = arith.constant 0 : index
    %c0_101 = arith.constant 0 : index
    %c0_102 = arith.constant 0 : index
    %91 = vector.load %arg13[%c0_100, %c0_101, %c0_102] : memref<2x64x32xf32, #tpu.memory_space<vmem>>, vector<1x64x32xf32>
    %92 = vector.shape_cast %91 : vector<1x64x32xf32> to vector<64x32xf32>
    %cst_103 = arith.constant dense<0.000000e+00> : vector<8x32xf32>
    %93 = tpu.matmul %90, %92, %cst_103 {dimension_numbers = #tpu.dot_dimension_numbers<[1], [0], [0], [1], [0, 0, 1, 1], [], []>} : vector<8x64xf32>, vector<64x32xf32>, vector<8x32xf32> -> vector<8x32xf32>
    %c1_104 = arith.constant 1 : index
    %c0_105 = arith.constant 0 : index
    %c0_106 = arith.constant 0 : index
    %94 = vector.load %arg13[%c1_104, %c0_105, %c0_106] : memref<2x64x32xf32, #tpu.memory_space<vmem>>, vector<1x64x32xf32>
    %95 = vector.shape_cast %94 : vector<1x64x32xf32> to vector<64x32xf32>
    %cst_107 = arith.constant dense<0.000000e+00> : vector<8x32xf32>
    %96 = tpu.matmul %90, %95, %cst_107 {dimension_numbers = #tpu.dot_dimension_numbers<[1], [0], [0], [1], [0, 0, 1, 1], [], []>} : vector<8x64xf32>, vector<64x32xf32>, vector<8x32xf32> -> vector<8x32xf32>
    %97 = arith.maximumf %93, %96 : vector<8x32xf32>
    %c0_108 = arith.constant 0 : index
    %c0_109 = arith.constant 0 : index
    %98 = vector.load %arg23[%c0_108, %c0_109] : memref<8x32xf32, #tpu.memory_space<vmem>>, vector<8x32xf32>
    tpu.vector_store %arg23[%c0_108, %c0_109], %97 {strides = array<i32>} : memref<8x32xf32, #tpu.memory_space<vmem>>, vector<8x32xf32>,
    %cst_110 = arith.constant 0.000000e+00 : f32
    %99 = vector.broadcast %cst_110 : f32 to vector<6x64xf32>
    %c0_111 = arith.constant 0 : index
    %c0_112 = arith.constant 0 : index
    %100 = vector.load %arg23[%c0_111, %c0_112] : memref<8x32xf32, #tpu.memory_space<vmem>>, vector<6x32xf32>
    %c0_113 = arith.constant 0 : index
    %c0_114 = arith.constant 0 : index
    %c0_115 = arith.constant 0 : index
    %101 = vector.load %arg5[%c0_113, %c0_114, %c0_115] : memref<3x32x64xf32, #tpu.memory_space<vmem>>, vector<1x32x64xf32>
    %102 = vector.shape_cast %101 : vector<1x32x64xf32> to vector<32x64xf32>
    %cst_116 = arith.constant dense<0.000000e+00> : vector<6x64xf32>
    %103 = tpu.matmul %100, %102, %cst_116 {dimension_numbers = #tpu.dot_dimension_numbers<[1], [0], [0], [1], [0, 0, 1, 1], [], []>} : vector<6x32xf32>, vector<32x64xf32>, vector<6x64xf32> -> vector<6x64xf32>
    %104 = arith.addf %99, %103 : vector<6x64xf32>
    %c1_117 = arith.constant 1 : index
    %c0_118 = arith.constant 0 : index
    %105 = vector.load %arg23[%c1_117, %c0_118] : memref<8x32xf32, #tpu.memory_space<vmem>>, vector<6x32xf32>
    %c1_119 = arith.constant 1 : index
    %c0_120 = arith.constant 0 : index
    %c0_121 = arith.constant 0 : index
    %106 = vector.load %arg5[%c1_119, %c0_120, %c0_121] : memref<3x32x64xf32, #tpu.memory_space<vmem>>, vector<1x32x64xf32>
    %107 = vector.shape_cast %106 : vector<1x32x64xf32> to vector<32x64xf32>
    %cst_122 = arith.constant dense<0.000000e+00> : vector<6x64xf32>
    %108 = tpu.matmul %105, %107, %cst_122 {dimension_numbers = #tpu.dot_dimension_numbers<[1], [0], [0], [1], [0, 0, 1, 1], [], []>} : vector<6x32xf32>, vector<32x64xf32>, vector<6x64xf32> -> vector<6x64xf32>
    %109 = arith.addf %104, %108 : vector<6x64xf32>
    %c2_123 = arith.constant 2 : index
    %c0_124 = arith.constant 0 : index
    %110 = vector.load %arg23[%c2_123, %c0_124] : memref<8x32xf32, #tpu.memory_space<vmem>>, vector<6x32xf32>
    %c2_125 = arith.constant 2 : index
    %c0_126 = arith.constant 0 : index
    %c0_127 = arith.constant 0 : index
    %111 = vector.load %arg5[%c2_125, %c0_126, %c0_127] : memref<3x32x64xf32, #tpu.memory_space<vmem>>, vector<1x32x64xf32>
    %112 = vector.shape_cast %111 : vector<1x32x64xf32> to vector<32x64xf32>
    %cst_128 = arith.constant dense<0.000000e+00> : vector<6x64xf32>
    %113 = tpu.matmul %110, %112, %cst_128 {dimension_numbers = #tpu.dot_dimension_numbers<[1], [0], [0], [1], [0, 0, 1, 1], [], []>} : vector<6x32xf32>, vector<32x64xf32>, vector<6x64xf32> -> vector<6x64xf32>
    %114 = arith.addf %109, %113 : vector<6x64xf32>
    %cst_129 = arith.constant 0.000000e+00 : f32
    %115 = vector.broadcast %cst_129 : f32 to vector<6x64xf32>
    %116 = arith.maximumf %114, %115 : vector<6x64xf32>
    %c0_130 = arith.constant 0 : index
    %c0_131 = arith.constant 0 : index
    %c0_132 = arith.constant 0 : index
    %117 = vector.load %arg10[%c0_130, %c0_131, %c0_132] : memref<2x6x6xf32, #tpu.memory_space<vmem>>, vector<1x6x6xf32>
    %118 = vector.shape_cast %117 : vector<1x6x6xf32> to vector<6x6xf32>
    %cst_133 = arith.constant dense<0.000000e+00> : vector<6x64xf32>
    %119 = tpu.matmul %118, %116, %cst_133 {dimension_numbers = #tpu.dot_dimension_numbers<[1], [0], [0], [1], [0, 0, 1, 1], [], []>} : vector<6x6xf32>, vector<6x64xf32>, vector<6x64xf32> -> vector<6x64xf32>
    %c1_134 = arith.constant 1 : index
    %c0_135 = arith.constant 0 : index
    %c0_136 = arith.constant 0 : index
    %120 = vector.load %arg10[%c1_134, %c0_135, %c0_136] : memref<2x6x6xf32, #tpu.memory_space<vmem>>, vector<1x6x6xf32>
    %121 = vector.shape_cast %120 : vector<1x6x6xf32> to vector<6x6xf32>
    %cst_137 = arith.constant dense<0.000000e+00> : vector<6x64xf32>
    %122 = tpu.matmul %121, %116, %cst_137 {dimension_numbers = #tpu.dot_dimension_numbers<[1], [0], [0], [1], [0, 0, 1, 1], [], []>} : vector<6x6xf32>, vector<6x64xf32>, vector<6x64xf32> -> vector<6x64xf32>
    %123 = arith.maximumf %119, %122 : vector<6x64xf32>
    %c0_138 = arith.constant 0 : index
    %c0_139 = arith.constant 0 : index
    %c0_140 = arith.constant 0 : index
    %124 = vector.load %arg14[%c0_138, %c0_139, %c0_140] : memref<2x64x32xf32, #tpu.memory_space<vmem>>, vector<1x64x32xf32>
    %125 = vector.shape_cast %124 : vector<1x64x32xf32> to vector<64x32xf32>
    %cst_141 = arith.constant dense<0.000000e+00> : vector<6x32xf32>
    %126 = tpu.matmul %123, %125, %cst_141 {dimension_numbers = #tpu.dot_dimension_numbers<[1], [0], [0], [1], [0, 0, 1, 1], [], []>} : vector<6x64xf32>, vector<64x32xf32>, vector<6x32xf32> -> vector<6x32xf32>
    %c1_142 = arith.constant 1 : index
    %c0_143 = arith.constant 0 : index
    %c0_144 = arith.constant 0 : index
    %127 = vector.load %arg14[%c1_142, %c0_143, %c0_144] : memref<2x64x32xf32, #tpu.memory_space<vmem>>, vector<1x64x32xf32>
    %128 = vector.shape_cast %127 : vector<1x64x32xf32> to vector<64x32xf32>
    %cst_145 = arith.constant dense<0.000000e+00> : vector<6x32xf32>
    %129 = tpu.matmul %123, %128, %cst_145 {dimension_numbers = #tpu.dot_dimension_numbers<[1], [0], [0], [1], [0, 0, 1, 1], [], []>} : vector<6x64xf32>, vector<64x32xf32>, vector<6x32xf32> -> vector<6x32xf32>
    %130 = arith.maximumf %126, %129 : vector<6x32xf32>
    %c0_146 = arith.constant 0 : index
    %c0_147 = arith.constant 0 : index
    %131 = vector.load %arg24[%c0_146, %c0_147] : memref<6x32xf32, #tpu.memory_space<vmem>>, vector<6x32xf32>
    tpu.vector_store %arg24[%c0_146, %c0_147], %130 {strides = array<i32>} : memref<6x32xf32, #tpu.memory_space<vmem>>, vector<6x32xf32>,
    %cst_148 = arith.constant 0.000000e+00 : f32
    %132 = vector.broadcast %cst_148 : f32 to vector<4x32xf32>
    %c0_149 = arith.constant 0 : index
    %c0_150 = arith.constant 0 : index
    %133 = vector.load %arg24[%c0_149, %c0_150] : memref<6x32xf32, #tpu.memory_space<vmem>>, vector<4x32xf32>
    %c0_151 = arith.constant 0 : index
    %c0_152 = arith.constant 0 : index
    %c0_153 = arith.constant 0 : index
    %134 = vector.load %arg6[%c0_151, %c0_152, %c0_153] : memref<3x32x32xf32, #tpu.memory_space<vmem>>, vector<1x32x32xf32>
    %135 = vector.shape_cast %134 : vector<1x32x32xf32> to vector<32x32xf32>
    %cst_154 = arith.constant dense<0.000000e+00> : vector<4x32xf32>
    %136 = tpu.matmul %133, %135, %cst_154 {dimension_numbers = #tpu.dot_dimension_numbers<[1], [0], [0], [1], [0, 0, 1, 1], [], []>} : vector<4x32xf32>, vector<32x32xf32>, vector<4x32xf32> -> vector<4x32xf32>
    %137 = arith.addf %132, %136 : vector<4x32xf32>
    %c1_155 = arith.constant 1 : index
    %c0_156 = arith.constant 0 : index
    %138 = vector.load %arg24[%c1_155, %c0_156] : memref<6x32xf32, #tpu.memory_space<vmem>>, vector<4x32xf32>
    %c1_157 = arith.constant 1 : index
    %c0_158 = arith.constant 0 : index
    %c0_159 = arith.constant 0 : index
    %139 = vector.load %arg6[%c1_157, %c0_158, %c0_159] : memref<3x32x32xf32, #tpu.memory_space<vmem>>, vector<1x32x32xf32>
    %140 = vector.shape_cast %139 : vector<1x32x32xf32> to vector<32x32xf32>
    %cst_160 = arith.constant dense<0.000000e+00> : vector<4x32xf32>
    %141 = tpu.matmul %138, %140, %cst_160 {dimension_numbers = #tpu.dot_dimension_numbers<[1], [0], [0], [1], [0, 0, 1, 1], [], []>} : vector<4x32xf32>, vector<32x32xf32>, vector<4x32xf32> -> vector<4x32xf32>
    %142 = arith.addf %137, %141 : vector<4x32xf32>
    %c2_161 = arith.constant 2 : index
    %c0_162 = arith.constant 0 : index
    %143 = vector.load %arg24[%c2_161, %c0_162] : memref<6x32xf32, #tpu.memory_space<vmem>>, vector<4x32xf32>
    %c2_163 = arith.constant 2 : index
    %c0_164 = arith.constant 0 : index
    %c0_165 = arith.constant 0 : index
    %144 = vector.load %arg6[%c2_163, %c0_164, %c0_165] : memref<3x32x32xf32, #tpu.memory_space<vmem>>, vector<1x32x32xf32>
    %145 = vector.shape_cast %144 : vector<1x32x32xf32> to vector<32x32xf32>
    %cst_166 = arith.constant dense<0.000000e+00> : vector<4x32xf32>
    %146 = tpu.matmul %143, %145, %cst_166 {dimension_numbers = #tpu.dot_dimension_numbers<[1], [0], [0], [1], [0, 0, 1, 1], [], []>} : vector<4x32xf32>, vector<32x32xf32>, vector<4x32xf32> -> vector<4x32xf32>
    %147 = arith.addf %142, %146 : vector<4x32xf32>
    %cst_167 = arith.constant 0.000000e+00 : f32
    %148 = vector.broadcast %cst_167 : f32 to vector<4x32xf32>
    %149 = arith.maximumf %147, %148 : vector<4x32xf32>
    %c0_168 = arith.constant 0 : index
    %c0_169 = arith.constant 0 : index
    %150 = vector.load %arg16[%c0_168, %c0_169] : memref<32x64xf32, #tpu.memory_space<vmem>>, vector<32x64xf32>
    %cst_170 = arith.constant 0.000000e+00 : f32
    %151 = vector.broadcast %cst_170 : f32 to vector<2x64xf32>
    %c0_171 = arith.constant 0 : index
    %c0_172 = arith.constant 0 : index
    %c0_173 = arith.constant 0 : index
    %152 = vector.load %arg15[%c0_171, %c0_172, %c0_173] : memref<1x2x4xf32, #tpu.memory_space<vmem>>, vector<1x2x4xf32>
    %153 = vector.shape_cast %152 : vector<1x2x4xf32> to vector<2x4xf32>
    %cst_174 = arith.constant dense<0.000000e+00> : vector<2x32xf32>
    %154 = tpu.matmul %153, %149, %cst_174 {dimension_numbers = #tpu.dot_dimension_numbers<[1], [0], [0], [1], [0, 0, 1, 1], [], []>} : vector<2x4xf32>, vector<4x32xf32>, vector<2x32xf32> -> vector<2x32xf32>
    %cst_175 = arith.constant dense<0.000000e+00> : vector<2x64xf32>
    %155 = tpu.matmul %154, %150, %cst_175 {dimension_numbers = #tpu.dot_dimension_numbers<[1], [0], [0], [1], [0, 0, 1, 1], [], []>} : vector<2x32xf32>, vector<32x64xf32>, vector<2x64xf32> -> vector<2x64xf32>
    %156 = arith.addf %151, %155 : vector<2x64xf32>
    %c0_176 = arith.constant 0 : index
    %c0_177 = arith.constant 0 : index
    %157 = vector.load %arg17[%c0_176, %c0_177] : memref<1x64xf32, #tpu.memory_space<vmem>>, vector<1x64xf32>
    %158 = vector.broadcast %157 : vector<1x64xf32> to vector<2x64xf32>
    %159 = arith.addf %156, %158 : vector<2x64xf32>
    %cst_178 = arith.constant 0.000000e+00 : f32
    %160 = vector.broadcast %cst_178 : f32 to vector<2x64xf32>
    %161 = arith.maximumf %159, %160 : vector<2x64xf32>
    %c0_179 = arith.constant 0 : index
    %c0_180 = arith.constant 0 : index
    %162 = vector.load %arg18[%c0_179, %c0_180] : memref<64x128xf32, #tpu.memory_space<vmem>>, vector<64x128xf32>
    %cst_181 = arith.constant dense<0.000000e+00> : vector<2x128xf32>
    %163 = tpu.matmul %161, %162, %cst_181 {dimension_numbers = #tpu.dot_dimension_numbers<[1], [0], [0], [1], [0, 0, 1, 1], [], []>} : vector<2x64xf32>, vector<64x128xf32>, vector<2x128xf32> -> vector<2x128xf32>
    %c0_182 = arith.constant 0 : index
    %c0_183 = arith.constant 0 : index
    %164 = vector.load %arg19[%c0_182, %c0_183] : memref<1x128xf32, #tpu.memory_space<vmem>>, vector<1x128xf32>
    %165 = vector.broadcast %164 : vector<1x128xf32> to vector<2x128xf32>
    %166 = arith.addf %163, %165 : vector<2x128xf32>
    %c0_184 = arith.constant 0 : index
    %c0_185 = arith.constant 0 : index
    %167 = vector.load %arg20[%c0_184, %c0_185] : memref<2x128xf32, #tpu.memory_space<vmem>>, vector<2x128xf32>
    tpu.vector_store %arg20[%c0_184, %c0_185], %166 {strides = array<i32>} : memref<2x128xf32, #tpu.memory_space<vmem>>, vector<2x128xf32>,
    return
  }
  func.func @transform_0(%arg0: i32) -> (i32, i32) {
    %c0_i32 = arith.constant 0 : i32
    %c0_i32_0 = arith.constant 0 : i32
    %c0_i32_1 = arith.constant 0 : i32
    return %c0_i32, %c0_i32_0 : i32, i32
  }
  func.func @transform_1(%arg0: i32) -> (i32, i32, i32) {
    %c0_i32 = arith.constant 0 : i32
    %c0_i32_0 = arith.constant 0 : i32
    %c0_i32_1 = arith.constant 0 : i32
    %c0_i32_2 = arith.constant 0 : i32
    return %c0_i32, %c0_i32_0, %c0_i32_1 : i32, i32, i32
  }
  func.func @transform_2(%arg0: i32) -> (i32, i32, i32) {
    %c0_i32 = arith.constant 0 : i32
    %c0_i32_0 = arith.constant 0 : i32
    %c0_i32_1 = arith.constant 0 : i32
    %c0_i32_2 = arith.constant 0 : i32
    return %c0_i32, %c0_i32_0, %c0_i32_1 : i32, i32, i32
  }
  func.func @transform_3(%arg0: i32) -> (i32, i32, i32) {
    %c0_i32 = arith.constant 0 : i32
    %c0_i32_0 = arith.constant 0 : i32
    %c0_i32_1 = arith.constant 0 : i32
    %c0_i32_2 = arith.constant 0 : i32
    return %c0_i32, %c0_i32_0, %c0_i32_1 : i32, i32, i32
  }
  func.func @transform_4(%arg0: i32) -> (i32, i32, i32) {
    %c0_i32 = arith.constant 0 : i32
    %c0_i32_0 = arith.constant 0 : i32
    %c0_i32_1 = arith.constant 0 : i32
    %c0_i32_2 = arith.constant 0 : i32
    return %c0_i32, %c0_i32_0, %c0_i32_1 : i32, i32, i32
  }
  func.func @transform_5(%arg0: i32) -> (i32, i32, i32) {
    %c0_i32 = arith.constant 0 : i32
    %c0_i32_0 = arith.constant 0 : i32
    %c0_i32_1 = arith.constant 0 : i32
    %c0_i32_2 = arith.constant 0 : i32
    return %c0_i32, %c0_i32_0, %c0_i32_1 : i32, i32, i32
  }
  func.func @transform_6(%arg0: i32) -> (i32, i32, i32) {
    %c0_i32 = arith.constant 0 : i32
    %c0_i32_0 = arith.constant 0 : i32
    %c0_i32_1 = arith.constant 0 : i32
    %c0_i32_2 = arith.constant 0 : i32
    return %c0_i32, %c0_i32_0, %c0_i32_1 : i32, i32, i32
  }
  func.func @transform_7(%arg0: i32) -> (i32, i32, i32) {
    %c0_i32 = arith.constant 0 : i32
    %c0_i32_0 = arith.constant 0 : i32
    %c0_i32_1 = arith.constant 0 : i32
    %c0_i32_2 = arith.constant 0 : i32
    return %c0_i32, %c0_i32_0, %c0_i32_1 : i32, i32, i32
  }
  func.func @transform_8(%arg0: i32) -> (i32, i32, i32) {
    %c0_i32 = arith.constant 0 : i32
    %c0_i32_0 = arith.constant 0 : i32
    %c0_i32_1 = arith.constant 0 : i32
    %c0_i32_2 = arith.constant 0 : i32
    return %c0_i32, %c0_i32_0, %c0_i32_1 : i32, i32, i32
  }
  func.func @transform_9(%arg0: i32) -> (i32, i32, i32) {
    %c0_i32 = arith.constant 0 : i32
    %c0_i32_0 = arith.constant 0 : i32
    %c0_i32_1 = arith.constant 0 : i32
    %c0_i32_2 = arith.constant 0 : i32
    return %c0_i32, %c0_i32_0, %c0_i32_1 : i32, i32, i32
  }
  func.func @transform_10(%arg0: i32) -> (i32, i32, i32) {
    %c0_i32 = arith.constant 0 : i32
    %c0_i32_0 = arith.constant 0 : i32
    %c0_i32_1 = arith.constant 0 : i32
    %c0_i32_2 = arith.constant 0 : i32
    return %c0_i32, %c0_i32_0, %c0_i32_1 : i32, i32, i32
  }
  func.func @transform_11(%arg0: i32) -> (i32, i32, i32) {
    %c0_i32 = arith.constant 0 : i32
    %c0_i32_0 = arith.constant 0 : i32
    %c0_i32_1 = arith.constant 0 : i32
    %c0_i32_2 = arith.constant 0 : i32
    return %c0_i32, %c0_i32_0, %c0_i32_1 : i32, i32, i32
  }
  func.func @transform_12(%arg0: i32) -> (i32, i32, i32) {
    %c0_i32 = arith.constant 0 : i32
    %c0_i32_0 = arith.constant 0 : i32
    %c0_i32_1 = arith.constant 0 : i32
    %c0_i32_2 = arith.constant 0 : i32
    return %c0_i32, %c0_i32_0, %c0_i32_1 : i32, i32, i32
  }
  func.func @transform_13(%arg0: i32) -> (i32, i32, i32) {
    %c0_i32 = arith.constant 0 : i32
    %c0_i32_0 = arith.constant 0 : i32
    %c0_i32_1 = arith.constant 0 : i32
    %c0_i32_2 = arith.constant 0 : i32
    return %c0_i32, %c0_i32_0, %c0_i32_1 : i32, i32, i32
  }
  func.func @transform_14(%arg0: i32) -> (i32, i32, i32) {
    %c0_i32 = arith.constant 0 : i32
    %c0_i32_0 = arith.constant 0 : i32
    %c0_i32_1 = arith.constant 0 : i32
    %c0_i32_2 = arith.constant 0 : i32
    return %c0_i32, %c0_i32_0, %c0_i32_1 : i32, i32, i32
  }
  func.func @transform_15(%arg0: i32) -> (i32, i32) {
    %c0_i32 = arith.constant 0 : i32
    %c0_i32_0 = arith.constant 0 : i32
    %c0_i32_1 = arith.constant 0 : i32
    return %c0_i32, %c0_i32_0 : i32, i32
  }
  func.func @transform_16(%arg0: i32) -> (i32, i32) {
    %c0_i32 = arith.constant 0 : i32
    %c0_i32_0 = arith.constant 0 : i32
    %c0_i32_1 = arith.constant 0 : i32
    return %c0_i32, %c0_i32_0 : i32, i32
  }
  func.func @transform_17(%arg0: i32) -> (i32, i32) {
    %c0_i32 = arith.constant 0 : i32
    %c0_i32_0 = arith.constant 0 : i32
    %c0_i32_1 = arith.constant 0 : i32
    return %c0_i32, %c0_i32_0 : i32, i32
  }
  func.func @transform_18(%arg0: i32) -> (i32, i32) {
    %c0_i32 = arith.constant 0 : i32
    %c0_i32_0 = arith.constant 0 : i32
    %c0_i32_1 = arith.constant 0 : i32
    return %c0_i32, %c0_i32_0 : i32, i32
  }
  func.func @transform_19(%arg0: i32) -> (i32, i32) {
    %c0_i32 = arith.constant 0 : i32
    %c0_i32_0 = arith.constant 0 : i32
    %c0_i32_1 = arith.constant 0 : i32
    return %c0_i32, %c0_i32_0 : i32, i32
  }
}

</mosaic_0001>

<llo_original>
// kernel: tpu_custom_call.1
$region0: #{tpu_custom_call.1}
  #allocation0 [shape = 'u32[]', space=smem, size = 0x4, offset = 0x4, fixed_abs, tag = 'smem constant byte address 0x4 - core index']
  #allocation1 [shape = 'u32[72,128]{1,0:T(1,128)}', space=vmem, size = 0x9000, scoped, tag = 'internal scratch']
  #allocation2 [shape = 'f32[20,64]{1,0:T(8,128)}', space=vmem, size = 0x3000, scoped, tag = 'scratch operand']
  #allocation3 [shape = 'f32[12,64]{1,0:T(8,128)}', space=vmem, size = 0x2000, scoped, tag = 'scratch operand']
  #allocation4 [shape = 'f32[8,32]{1,0:T(8,128)}', space=vmem, size = 0x1000, scoped, tag = 'scratch operand']
  #allocation5 [shape = 'f32[6,32]{1,0:T(8,128)}', space=vmem, size = 0x1000, scoped, tag = 'scratch operand']
  %s0 = inlined_call_operand.vmem [shape: f32[36,48], index: 0, kind: input, shape index: {}]
  %s1 = inlined_call_operand.vmem [shape: f32[3,48,128], index: 1, kind: input, shape index: {}]
  %s2 = inlined_call_operand.vmem [shape: f32[3,64,128], index: 2, kind: input, shape index: {}]
  %s3 = inlined_call_operand.vmem [shape: f32[3,64,64], index: 3, kind: input, shape index: {}]
  %s4 = inlined_call_operand.vmem [shape: f32[3,32,64], index: 4, kind: input, shape index: {}]
  %s5 = inlined_call_operand.vmem [shape: f32[3,32,32], index: 5, kind: input, shape index: {}]
  %s6 = inlined_call_operand.vmem [shape: f32[2,20,34], index: 6, kind: input, shape index: {}]
  %s7 = inlined_call_operand.vmem [shape: f32[2,12,18], index: 7, kind: input, shape index: {}]
  %s8 = inlined_call_operand.vmem [shape: f32[2,8,10], index: 8, kind: input, shape index: {}]
  %s9 = inlined_call_operand.vmem [shape: f32[2,6,6], index: 9, kind: input, shape index: {}]
  %s10 = inlined_call_operand.vmem [shape: f32[2,128,64], index: 10, kind: input, shape index: {}]
  %s11 = inlined_call_operand.vmem [shape: f32[2,128,64], index: 11, kind: input, shape index: {}]
  %s12 = inlined_call_operand.vmem [shape: f32[2,64,32], index: 12, kind: input, shape index: {}]
  %s13 = inlined_call_operand.vmem [shape: f32[2,64,32], index: 13, kind: input, shape index: {}]
  %s14 = inlined_call_operand.vmem [shape: f32[1,2,4], index: 14, kind: input, shape index: {}]
  %s15 = inlined_call_operand.vmem [shape: f32[32,64], index: 15, kind: input, shape index: {}]
  %s16 = inlined_call_operand.vmem [shape: f32[1,64], index: 16, kind: input, shape index: {}]
  %s17 = inlined_call_operand.vmem [shape: f32[64,128], index: 17, kind: input, shape index: {}]
  %s18 = inlined_call_operand.vmem [shape: f32[1,128], index: 18, kind: input, shape index: {}]
  %s19 = inlined_call_operand.hbm [shape: f32[2,128], index: 19, kind: output, shape index: {}]
  %s20 = sld [smem:[#allocation0]]
  $region86: #{tpu_custom_call.1} parent=0
    _
  %s22 = ssub.s32 1, %s20
  %s23 = scalar_select 0, %s22, %s20
  $region1: #{tpu_custom_call.1} parent=0
    #allocation6 [shape = 'u8[1024]{0}', space=vmem, size = 0x400, scoped, tag = 'output window, operand 0, single buffered']
    #allocation7 [shape = 's32[1]{0}', space=sflag, size = 0x4, scoped, tag = 'scoped memory for tpu_custom_call.1']
    %24 = vsyncpa [#allocation7], 0
    // Predicated region
    $region2: #{tpu_custom_call.1} parent=1 // pred_check
      _
    $region3: #{tpu_custom_call.1} parent=1 // pred_check_branch
      %26 = sbr.rel (0) target = $region5
    $region4: #{tpu_custom_call.1} parent=1 // pred_region
      _
    $region5: #{tpu_custom_call.1} parent=1 // pred_fallthru
      _
    // Predicated region
    $region6: #{tpu_custom_call.1} parent=1 // pred_check
      _
    $region7: #{tpu_custom_call.1} parent=1 // pred_check_branch
      %28 = sbr.rel (0) target = $region9
    $region8: #{tpu_custom_call.1} parent=1 // pred_region
      _
    $region9: #{tpu_custom_call.1} parent=1 // pred_fallthru
      _
    // Predicated region
    $region10: #{tpu_custom_call.1} parent=1 // pred_check
      _
    $region11: #{tpu_custom_call.1} parent=1 // pred_check_branch
      %30 = sbr.rel (0) target = $region13
    $region12: #{tpu_custom_call.1} parent=1 // pred_region
      _
    $region13: #{tpu_custom_call.1} parent=1 // pred_fallthru
      _
    // Predicated region
    $region14: #{tpu_custom_call.1} parent=1 // pred_check
      _
    $region15: #{tpu_custom_call.1} parent=1 // pred_check_branch
      %32 = sbr.rel (0) target = $region17
    $region16: #{tpu_custom_call.1} parent=1 // pred_region
      _
    $region17: #{tpu_custom_call.1} parent=1 // pred_fallthru
      _
    // Predicated region
    $region18: #{tpu_custom_call.1} parent=1 // pred_check
      _
    $region19: #{tpu_custom_call.1} parent=1 // pred_check_branch
      %34 = sbr.rel (0) target = $region21
    $region20: #{tpu_custom_call.1} parent=1 // pred_region
      _
    $region21: #{tpu_custom_call.1} parent=1 // pred_fallthru
      _
    // Predicated region
    $region22: #{tpu_custom_call.1} parent=1 // pred_check
      _
    $region23: #{tpu_custom_call.1} parent=1 // pred_check_branch
      %36 = sbr.rel (0) target = $region25
    $region24: #{tpu_custom_call.1} parent=1 // pred_region
      _
    $region25: #{tpu_custom_call.1} parent=1 // pred_fallthru
      _
    // Predicated region
    $region26: #{tpu_custom_call.1} parent=1 // pred_check
      _
    $region27: #{tpu_custom_call.1} parent=1 // pred_check_branch
      %38 = sbr.rel (0) target = $region29
    $region28: #{tpu_custom_call.1} parent=1 // pred_region
      _
    $region29: #{tpu_custom_call.1} parent=1 // pred_fallthru
      _
    // Predicated region
    $region30: #{tpu_custom_call.1} parent=1 // pred_check
      _
    $region31: #{tpu_custom_call.1} parent=1 // pred_check_branch
      %40 = sbr.rel (0) target = $region33
    $region32: #{tpu_custom_call.1} parent=1 // pred_region
      _
    $region33: #{tpu_custom_call.1} parent=1 // pred_fallthru
      _
    // Predicated region
    $region34: #{tpu_custom_call.1} parent=1 // pred_check
      _
    $region35: #{tpu_custom_call.1} parent=1 // pred_check_branch
      %42 = sbr.rel (0) target = $region37
    $region36: #{tpu_custom_call.1} parent=1 // pred_region
      _
    $region37: #{tpu_custom_call.1} parent=1 // pred_fallthru
      _
    // Predicated region
    $region38: #{tpu_custom_call.1} parent=1 // pred_check
      _
    $region39: #{tpu_custom_call.1} parent=1 // pred_check_branch
      %44 = sbr.rel (0) target = $region41
    $region40: #{tpu_custom_call.1} parent=1 // pred_region
      _
    $region41: #{tpu_custom_call.1} parent=1 // pred_fallthru
      _
    // Predicated region
    $region42: #{tpu_custom_call.1} parent=1 // pred_check
      _
    $region43: #{tpu_custom_call.1} parent=1 // pred_check_branch
      %46 = sbr.rel (0) target = $region45
    $region44: #{tpu_custom_call.1} parent=1 // pred_region
      _
    $region45: #{tpu_custom_call.1} parent=1 // pred_fallthru
      _
    // Predicated region
    $region46: #{tpu_custom_call.1} parent=1 // pred_check
      _
    $region47: #{tpu_custom_call.1} parent=1 // pred_check_branch
      %48 = sbr.rel (0) target = $region49
    $region48: #{tpu_custom_call.1} parent=1 // pred_region
      _
    $region49: #{tpu_custom_call.1} parent=1 // pred_fallthru
      _
    // Predicated region
    $region50: #{tpu_custom_call.1} parent=1 // pred_check
      _
    $region51: #{tpu_custom_call.1} parent=1 // pred_check_branch
      %50 = sbr.rel (0) target = $region53
    $region52: #{tpu_custom_call.1} parent=1 // pred_region
      _
    $region53: #{tpu_custom_call.1} parent=1 // pred_fallthru
      _
    // Predicated region
    $region54: #{tpu_custom_call.1} parent=1 // pred_check
      _
    $region55: #{tpu_custom_call.1} parent=1 // pred_check_branch
      %52 = sbr.rel (0) target = $region57
    $region56: #{tpu_custom_call.1} parent=1 // pred_region
      _
    $region57: #{tpu_custom_call.1} parent=1 // pred_fallthru
      _
    // Predicated region
    $region58: #{tpu_custom_call.1} parent=1 // pred_check
      _
    $region59: #{tpu_custom_call.1} parent=1 // pred_check_branch
      %54 = sbr.rel (0) target = $region61
    $region60: #{tpu_custom_call.1} parent=1 // pred_region
      _
    $region61: #{tpu_custom_call.1} parent=1 // pred_fallthru
      _
    // Predicated region
    $region62: #{tpu_custom_call.1} parent=1 // pred_check
      _
    $region63: #{tpu_custom_call.1} parent=1 // pred_check_branch
      %56 = sbr.rel (0) target = $region65
    $region64: #{tpu_custom_call.1} parent=1 // pred_region
      _
    $region65: #{tpu_custom_call.1} parent=1 // pred_fallthru
      _
    // Predicated region
    $region66: #{tpu_custom_call.1} parent=1 // pred_check
      _
    $region67: #{tpu_custom_call.1} parent=1 // pred_check_branch
      %58 = sbr.rel (0) target = $region69
    $region68: #{tpu_custom_call.1} parent=1 // pred_region
      _
    $region69: #{tpu_custom_call.1} parent=1 // pred_fallthru
      _
    // Predicated region
    $region70: #{tpu_custom_call.1} parent=1 // pred_check
      _
    $region71: #{tpu_custom_call.1} parent=1 // pred_check_branch
      %60 = sbr.rel (0) target = $region73
    $region72: #{tpu_custom_call.1} parent=1 // pred_region
      _
    $region73: #{tpu_custom_call.1} parent=1 // pred_fallthru
      _
    // Predicated region
    $region74: #{tpu_custom_call.1} parent=1 // pred_check
      _
    $region75: #{tpu_custom_call.1} parent=1 // pred_check_branch
      %62 = sbr.rel (0) target = $region77
    $region76: #{tpu_custom_call.1} parent=1 // pred_region
      _
    $region77: #{tpu_custom_call.1} parent=1 // pred_fallthru
      _
    %v63 = vld [vmem:[%s0] sm:$0xff]
    %v64 = vld [vmem:[%s0 + $0x8] sm:$0xff]
    %v65 = vld [vmem:[%s0 + $0x10] sm:$0xff]
    %v66 = vld [vmem:[%s0 + $0x18] sm:$0xff]
    %v67 = vld [vmem:[%s0 + $0x20] sm:$0x3]
    %v68 = vld [vmem:[%s1] sm:$0xff]
    %v69 = vld [vmem:[%s1 + $0x8] sm:$0xff]
    %v70 = vld [vmem:[%s1 + $0x10] sm:$0xff]
    %v71 = vld [vmem:[%s1 + $0x18] sm:$0xff]
    %v72 = vld [vmem:[%s1 + $0x20] sm:$0xff]
    %v73 = vld [vmem:[%s1 + $0x28] sm:$0xff]
    %v74 = vld [vmem:[%s0 + $0x1] sm:$0xff]
    %v75 = vld [vmem:[%s0 + $0x9] sm:$0xff]
    %v76 = vld [vmem:[%s0 + $0x11] sm:$0xff]
    %v77 = vld [vmem:[%s0 + $0x19] sm:$0xff]
    %v78 = vld [vmem:[%s0 + $0x21] sm:$0x3]
    %s79 = scalar_lea.vmem %s1, 48
    %v80 = vld [vmem:[%s79] sm:$0xff]
    %v81 = vld [vmem:[%s79 + $0x8] sm:$0xff]
    %v82 = vld [vmem:[%s79 + $0x10] sm:$0xff]
    %v83 = vld [vmem:[%s79 + $0x18] sm:$0xff]
    %v84 = vld [vmem:[%s79 + $0x20] sm:$0xff]
    %v85 = vld [vmem:[%s79 + $0x28] sm:$0xff]
    %vm86 = vcmask 392192
    %v88 = vsel %vm86, %v74, 0
    %v91 = vsel %vm86, %v75, 0
    %v94 = vsel %vm86, %v76, 0
    %v97 = vsel %vm86, %v77, 0
    %v100 = vsel %vm86, %v78, 0
    %102 = vmatpush.msra.mxu0 0.0
    %103 = vmatpush.msra.mxu0 0.0
    %104 = vmatpush.msra.mxu0 0.0
    %105 = vmatpush.msra.mxu0 0.0
    %106 = vmatpush.msra.mxu0 0.0
    %107 = vmatpush.msra.mxu0 0.0
    %108 = vmatpush.msra.mxu0 0.0
    %109 = vmatpush.msra.mxu0 0.0
    %110 = vmatpush.msra.mxu0 0.0
    %111 = vmatpush.msra.mxu0 0.0
    %112 = vmatpush.msra.mxu0 %v85
    %113 = vmatpush.msra.mxu0 %v84
    %114 = vmatpush.msra.mxu0 %v83
    %115 = vmatpush.msra.mxu0 %v82
    %116 = vmatpush.msra.mxu0 %v81
    %117 = vmatpush.msra.mxu0 %v80
    %118 = vmatmul.f32.gmra.mxu0 %v88
    %v119 = vpop.f32.mrf.mxu0
    %v120 = vadd.f32 0.0, %v119
    %121 = vmatmul.f32.gmra.mxu0 %v91
    %v122 = vpop.f32.mrf.mxu0
    %v123 = vadd.f32 0.0, %v122
    %124 = vmatmul.f32.gmra.mxu0 %v94
    %v125 = vpop.f32.mrf.mxu0
    %v126 = vadd.f32 0.0, %v125
    %127 = vmatmul.f32.gmra.mxu0 %v97
    %v128 = vpop.f32.mrf.mxu0
    %v129 = vadd.f32 0.0, %v128
    %130 = vmatmul.f32.gmra.mxu0 %v100
    %v131 = vpop.f32.mrf.mxu0
    %v132 = vadd.f32 0.0, %v131
    %133 = vdwg.mxu0
    %v135 = vsel %vm86, %v63, 0
    %v138 = vsel %vm86, %v64, 0
    %v141 = vsel %vm86, %v65, 0
    %v144 = vsel %vm86, %v66, 0
    %v147 = vsel %vm86, %v67, 0
    %149 = vmatpush.msra.mxu0 0.0
    %150 = vmatpush.msra.mxu0 0.0
    %151 = vmatpush.msra.mxu0 0.0
    %152 = vmatpush.msra.mxu0 0.0
    %153 = vmatpush.msra.mxu0 0.0
    %154 = vmatpush.msra.mxu0 0.0
    %155 = vmatpush.msra.mxu0 0.0
    %156 = vmatpush.msra.mxu0 0.0
    %157 = vmatpush.msra.mxu0 0.0
    %158 = vmatpush.msra.mxu0 0.0
    %159 = vmatpush.msra.mxu0 %v73
    %160 = vmatpush.msra.mxu0 %v72
    %161 = vmatpush.msra.mxu0 %v71
    %162 = vmatpush.msra.mxu0 %v70
    %163 = vmatpush.msra.mxu0 %v69
    %164 = vmatpush.msra.mxu0 %v68
    %165 = vmatmul.f32.gmra.mxu0 %v135
    %v166 = vpop.f32.mrf.mxu0
    %v167 = vadd.f32 %v120, %v166
    %168 = vmatmul.f32.gmra.mxu0 %v138
    %v169 = vpop.f32.mrf.mxu0
    %v170 = vadd.f32 %v123, %v169
    %171 = vmatmul.f32.gmra.mxu0 %v141
    %v172 = vpop.f32.mrf.mxu0
    %v173 = vadd.f32 %v126, %v172
    %174 = vmatmul.f32.gmra.mxu0 %v144
    %v175 = vpop.f32.mrf.mxu0
    %v176 = vadd.f32 %v129, %v175
    %177 = vmatmul.f32.gmra.mxu0 %v147
    %v178 = vpop.f32.mrf.mxu0
    %v179 = vadd.f32 %v132, %v178
    %180 = vdwg.mxu0
    %v181 = vld [vmem:[%s0 + $0x2] sm:$0xff]
    %v182 = vld [vmem:[%s0 + $0xa] sm:$0xff]
    %v183 = vld [vmem:[%s0 + $0x12] sm:$0xff]
    %v184 = vld [vmem:[%s0 + $0x1a] sm:$0xff]
    %v185 = vld [vmem:[%s0 + $0x22] sm:$0x3]
    %s186 = scalar_lea.vmem %s1, 96
    %v187 = vld [vmem:[%s186] sm:$0xff]
    %v188 = vld [vmem:[%s186 + $0x8] sm:$0xff]
    %v189 = vld [vmem:[%s186 + $0x10] sm:$0xff]
    %v190 = vld [vmem:[%s186 + $0x18] sm:$0xff]
    %v191 = vld [vmem:[%s186 + $0x20] sm:$0xff]
    %v192 = vld [vmem:[%s186 + $0x28] sm:$0xff]
    %v194 = vsel %vm86, %v181, 0
    %v197 = vsel %vm86, %v182, 0
    %v200 = vsel %vm86, %v183, 0
    %v203 = vsel %vm86, %v184, 0
    %v206 = vsel %vm86, %v185, 0
    %208 = vmatpush.msra.mxu0 0.0
    %209 = vmatpush.msra.mxu0 0.0
    %210 = vmatpush.msra.mxu0 0.0
    %211 = vmatpush.msra.mxu0 0.0
    %212 = vmatpush.msra.mxu0 0.0
    %213 = vmatpush.msra.mxu0 0.0
    %214 = vmatpush.msra.mxu0 0.0
    %215 = vmatpush.msra.mxu0 0.0
    %216 = vmatpush.msra.mxu0 0.0
    %217 = vmatpush.msra.mxu0 0.0
    %218 = vmatpush.msra.mxu0 %v192
    %219 = vmatpush.msra.mxu0 %v191
    %220 = vmatpush.msra.mxu0 %v190
    %221 = vmatpush.msra.mxu0 %v189
    %222 = vmatpush.msra.mxu0 %v188
    %223 = vmatpush.msra.mxu0 %v187
    %224 = vmatmul.f32.gmra.mxu0 %v194
    %v225 = vpop.f32.mrf.mxu0
    %v226 = vadd.f32 0.0, %v225
    %227 = vmatmul.f32.gmra.mxu0 %v197
    %v228 = vpop.f32.mrf.mxu0
    %v229 = vadd.f32 0.0, %v228
    %230 = vmatmul.f32.gmra.mxu0 %v200
    %v231 = vpop.f32.mrf.mxu0
    %v232 = vadd.f32 0.0, %v231
    %233 = vmatmul.f32.gmra.mxu0 %v203
    %v234 = vpop.f32.mrf.mxu0
    %v235 = vadd.f32 0.0, %v234
    %236 = vmatmul.f32.gmra.mxu0 %v206
    %v237 = vpop.f32.mrf.mxu0
    %v238 = vadd.f32 0.0, %v237
    %239 = vdwg.mxu0
    %v240 = vadd.f32 %v167, %v226
    %v241 = vadd.f32 %v170, %v229
    %v242 = vadd.f32 %v173, %v232
    %v243 = vadd.f32 %v176, %v235
    %v244 = vadd.f32 %v179, %v238
    %v245 = vmax.f32 %v240, 0.0
    %v246 = vmax.f32 %v241, 0.0
    %v247 = vmax.f32 %v242, 0.0
    %v248 = vmax.f32 %v243, 0.0
    %v249 = vmax.f32 %v244, 0.0
    %v250 = vld [vmem:[%s6] sm:$0xff]
    %v251 = vld [vmem:[%s6 + $0x8] sm:$0xff]
    %v252 = vld [vmem:[%s6 + $0x10] sm:$0xf]
    %vm253 = vcmask 277504
    %v255 = vsel %vm253, %v250, 0
    %v258 = vsel %vm253, %v251, 0
    %v261 = vsel %vm253, %v252, 0
    %vm263 = vcmask 1041408
    %v265 = vsel %vm263, %v249, 0
    %267 = vmatpush.msra.mxu0 0.0
    %268 = vmatpush.msra.mxu0 0.0
    %269 = vmatpush.msra.mxu0 0.0
    %270 = vmatpush.msra.mxu0 0.0
    %271 = vmatpush.msra.mxu0 0.0
    %272 = vmatpush.msra.mxu0 0.0
    %273 = vmatpush.msra.mxu0 0.0
    %274 = vmatpush.msra.mxu0 0.0
    %275 = vmatpush.msra.mxu0 0.0
    %276 = vmatpush.msra.mxu0 0.0
    %277 = vmatpush.msra.mxu0 0.0
    %278 = vmatpush.msra.mxu0 %v265
    %279 = vmatpush.msra.mxu0 %v248
    %280 = vmatpush.msra.mxu0 %v247
    %281 = vmatpush.msra.mxu0 %v246
    %282 = vmatpush.msra.mxu0 %v245
    %283 = vmatmul.f32.gmra.mxu0 %v255
    %v284 = vpop.f32.mrf.mxu0
    %v285 = vadd.f32 0.0, %v284
    %286 = vmatmul.f32.gmra.mxu0 %v258
    %v287 = vpop.f32.mrf.mxu0
    %v288 = vadd.f32 0.0, %v287
    %289 = vmatmul.f32.gmra.mxu0 %v261
    %v290 = vpop.f32.mrf.mxu0
    %v291 = vadd.f32 0.0, %v290
    %292 = vdwg.mxu0
    %s293 = scalar_lea.vmem %s6, 24
    %v294 = vld [vmem:[%s293] sm:$0xff]
    %v295 = vld [vmem:[%s293 + $0x8] sm:$0xff]
    %v296 = vld [vmem:[%s293 + $0x10] sm:$0xf]
    %v298 = vsel %vm253, %v294, 0
    %v301 = vsel %vm253, %v295, 0
    %v304 = vsel %vm253, %v296, 0
    %306 = vmatpush.msra.mxu0 0.0
    %307 = vmatpush.msra.mxu0 0.0
    %308 = vmatpush.msra.mxu0 0.0
    %309 = vmatpush.msra.mxu0 0.0
    %310 = vmatpush.msra.mxu0 0.0
    %311 = vmatpush.msra.mxu0 0.0
    %312 = vmatpush.msra.mxu0 0.0
    %313 = vmatpush.msra.mxu0 0.0
    %314 = vmatpush.msra.mxu0 0.0
    %315 = vmatpush.msra.mxu0 0.0
    %316 = vmatpush.msra.mxu0 0.0
    %317 = vmatpush.msra.mxu0 %v265
    %318 = vmatpush.msra.mxu0 %v248
    %319 = vmatpush.msra.mxu0 %v247
    %320 = vmatpush.msra.mxu0 %v246
    %321 = vmatpush.msra.mxu0 %v245
    %322 = vmatmul.f32.gmra.mxu0 %v298
    %v323 = vpop.f32.mrf.mxu0
    %v324 = vadd.f32 0.0, %v323
    %325 = vmatmul.f32.gmra.mxu0 %v301
    %v326 = vpop.f32.mrf.mxu0
    %v327 = vadd.f32 0.0, %v326
    %328 = vmatmul.f32.gmra.mxu0 %v304
    %v329 = vpop.f32.mrf.mxu0
    %v330 = vadd.f32 0.0, %v329
    %331 = vdwg.mxu0
    %v332 = vmax.f32 %v285, %v324
    %v333 = vmax.f32 %v288, %v327
    %v334 = vmax.f32 %v291, %v330
    %v335 = vld [vmem:[%s10] sm:$0xff]
    %v336 = vld [vmem:[%s10 + $0x8] sm:$0xff]
    %v337 = vld [vmem:[%s10 + $0x10] sm:$0xff]
    %v338 = vld [vmem:[%s10 + $0x18] sm:$0xff]
    %v339 = vld [vmem:[%s10 + $0x20] sm:$0xff]
    %v340 = vld [vmem:[%s10 + $0x28] sm:$0xff]
    %v341 = vld [vmem:[%s10 + $0x30] sm:$0xff]
    %v342 = vld [vmem:[%s10 + $0x38] sm:$0xff]
    %v343 = vld [vmem:[%s10 + $0x40] sm:$0xff]
    %v344 = vld [vmem:[%s10 + $0x48] sm:$0xff]
    %v345 = vld [vmem:[%s10 + $0x50] sm:$0xff]
    %v346 = vld [vmem:[%s10 + $0x58] sm:$0xff]
    %v347 = vld [vmem:[%s10 + $0x60] sm:$0xff]
    %v348 = vld [vmem:[%s10 + $0x68] sm:$0xff]
    %v349 = vld [vmem:[%s10 + $0x70] sm:$0xff]
    %v350 = vld [vmem:[%s10 + $0x78] sm:$0xff]
    %351 = vmatpush.msra.mxu0 %v350
    %352 = vmatpush.msra.mxu0 %v349
    %353 = vmatpush.msra.mxu0 %v348
    %354 = vmatpush.msra.mxu0 %v347
    %355 = vmatpush.msra.mxu0 %v346
    %356 = vmatpush.msra.mxu0 %v345
    %357 = vmatpush.msra.mxu0 %v344
    %358 = vmatpush.msra.mxu0 %v343
    %359 = vmatpush.msra.mxu0 %v342
    %360 = vmatpush.msra.mxu0 %v341
    %361 = vmatpush.msra.mxu0 %v340
    %362 = vmatpush.msra.mxu0 %v339
    %363 = vmatpush.msra.mxu0 %v338
    %364 = vmatpush.msra.mxu0 %v337
    %365 = vmatpush.msra.mxu0 %v336
    %366 = vmatpush.msra.mxu0 %v335
    %367 = vmatmul.f32.gmra.mxu0 %v332
    %v368 = vpop.f32.mrf.mxu0
    %v369 = vadd.f32 0.0, %v368
    %370 = vmatmul.f32.gmra.mxu0 %v333
    %v371 = vpop.f32.mrf.mxu0
    %v372 = vadd.f32 0.0, %v371
    %373 = vmatmul.f32.gmra.mxu0 %v334
    %v374 = vpop.f32.mrf.mxu0
    %v375 = vadd.f32 0.0, %v374
    %376 = vdwg.mxu0
    %s377 = scalar_lea.vmem %s10, 128
    %v378 = vld [vmem:[%s377] sm:$0xff]
    %v379 = vld [vmem:[%s377 + $0x8] sm:$0xff]
    %v380 = vld [vmem:[%s377 + $0x10] sm:$0xff]
    %v381 = vld [vmem:[%s377 + $0x18] sm:$0xff]
    %v382 = vld [vmem:[%s377 + $0x20] sm:$0xff]
    %v383 = vld [vmem:[%s377 + $0x28] sm:$0xff]
    %v384 = vld [vmem:[%s377 + $0x30] sm:$0xff]
    %v385 = vld [vmem:[%s377 + $0x38] sm:$0xff]
    %v386 = vld [vmem:[%s377 + $0x40] sm:$0xff]
    %v387 = vld [vmem:[%s377 + $0x48] sm:$0xff]
    %v388 = vld [vmem:[%s377 + $0x50] sm:$0xff]
    %v389 = vld [vmem:[%s377 + $0x58] sm:$0xff]
    %v390 = vld [vmem:[%s377 + $0x60] sm:$0xff]
    %v391 = vld [vmem:[%s377 + $0x68] sm:$0xff]
    %v392 = vld [vmem:[%s377 + $0x70] sm:$0xff]
    %v393 = vld [vmem:[%s377 + $0x78] sm:$0xff]
    %394 = vmatpush.msra.mxu0 %v393
    %395 = vmatpush.msra.mxu0 %v392
    %396 = vmatpush.msra.mxu0 %v391
    %397 = vmatpush.msra.mxu0 %v390
    %398 = vmatpush.msra.mxu0 %v389
    %399 = vmatpush.msra.mxu0 %v388
    %400 = vmatpush.msra.mxu0 %v387
    %401 = vmatpush.msra.mxu0 %v386
    %402 = vmatpush.msra.mxu0 %v385
    %403 = vmatpush.msra.mxu0 %v384
    %404 = vmatpush.msra.mxu0 %v383
    %405 = vmatpush.msra.mxu0 %v382
    %406 = vmatpush.msra.mxu0 %v381
    %407 = vmatpush.msra.mxu0 %v380
    %408 = vmatpush.msra.mxu0 %v379
    %409 = vmatpush.msra.mxu0 %v378
    %410 = vmatmul.f32.gmra.mxu0 %v332
    %v411 = vpop.f32.mrf.mxu0
    %v412 = vadd.f32 0.0, %v411
    %413 = vmatmul.f32.gmra.mxu0 %v333
    %v414 = vpop.f32.mrf.mxu0
    %v415 = vadd.f32 0.0, %v414
    %416 = vmatmul.f32.gmra.mxu0 %v334
    %v417 = vpop.f32.mrf.mxu0
    %v418 = vadd.f32 0.0, %v417
    %419 = vdwg.mxu0
    %v420 = vmax.f32 %v369, %v412
    %v421 = vmax.f32 %v372, %v415
    %v422 = vmax.f32 %v375, %v418
    %vm423 = vcmask 523264
    %424 = vst.msk [vmem:[#allocation2] sm:$0xff] %vm423, %v420
    %425 = vst.msk [vmem:[#allocation2 + $0x8] sm:$0xff] %vm423, %v421
    %vm426 = vcmask 519168
    %427 = vst.msk [vmem:[#allocation2 + $0x10] sm:$0xf] %vm426, %v422
    %v428 = vld [vmem:[#allocation2] sm:$0xff]
    %v429 = vld [vmem:[#allocation2 + $0x8] sm:$0xff]
    %v430 = vld [vmem:[#allocation2 + $0x10] sm:$0x3]
    %v431 = vld [vmem:[%s2] sm:$0xff]
    %v432 = vld [vmem:[%s2 + $0x8] sm:$0xff]
    %v433 = vld [vmem:[%s2 + $0x10] sm:$0xff]
    %v434 = vld [vmem:[%s2 + $0x18] sm:$0xff]
    %v435 = vld [vmem:[%s2 + $0x20] sm:$0xff]
    %v436 = vld [vmem:[%s2 + $0x28] sm:$0xff]
    %v437 = vld [vmem:[%s2 + $0x30] sm:$0xff]
    %v438 = vld [vmem:[%s2 + $0x38] sm:$0xff]
    %v439 = vld [vmem:[#allocation2 + $0x1] sm:$0xff]
    %v440 = vld [vmem:[#allocation2 + $0x9] sm:$0xff]
    %v441 = vld [vmem:[#allocation2 + $0x11] sm:$0x3]
    %s442 = scalar_lea.vmem %s2, 64
    %v443 = vld [vmem:[%s442] sm:$0xff]
    %v444 = vld [vmem:[%s442 + $0x8] sm:$0xff]
    %v445 = vld [vmem:[%s442 + $0x10] sm:$0xff]
    %v446 = vld [vmem:[%s442 + $0x18] sm:$0xff]
    %v447 = vld [vmem:[%s442 + $0x20] sm:$0xff]
    %v448 = vld [vmem:[%s442 + $0x28] sm:$0xff]
    %v449 = vld [vmem:[%s442 + $0x30] sm:$0xff]
    %v450 = vld [vmem:[%s442 + $0x38] sm:$0xff]
    %v452 = vsel %vm423, %v439, 0
    %v455 = vsel %vm423, %v440, 0
    %v458 = vsel %vm423, %v441, 0
    %460 = vmatpush.msra.mxu0 0.0
    %461 = vmatpush.msra.mxu0 0.0
    %462 = vmatpush.msra.mxu0 0.0
    %463 = vmatpush.msra.mxu0 0.0
    %464 = vmatpush.msra.mxu0 0.0
    %465 = vmatpush.msra.mxu0 0.0
    %466 = vmatpush.msra.mxu0 0.0
    %467 = vmatpush.msra.mxu0 0.0
    %468 = vmatpush.msra.mxu0 %v450
    %469 = vmatpush.msra.mxu0 %v449
    %470 = vmatpush.msra.mxu0 %v448
    %471 = vmatpush.msra.mxu0 %v447
    %472 = vmatpush.msra.mxu0 %v446
    %473 = vmatpush.msra.mxu0 %v445
    %474 = vmatpush.msra.mxu0 %v444
    %475 = vmatpush.msra.mxu0 %v443
    %476 = vmatmul.f32.gmra.mxu0 %v452
    %v477 = vpop.f32.mrf.mxu0
    %v478 = vadd.f32 0.0, %v477
    %479 = vmatmul.f32.gmra.mxu0 %v455
    %v480 = vpop.f32.mrf.mxu0
    %v481 = vadd.f32 0.0, %v480
    %482 = vmatmul.f32.gmra.mxu0 %v458
    %v483 = vpop.f32.mrf.mxu0
    %v484 = vadd.f32 0.0, %v483
    %485 = vdwg.mxu0
    %v487 = vsel %vm423, %v428, 0
    %v490 = vsel %vm423, %v429, 0
    %v493 = vsel %vm423, %v430, 0
    %495 = vmatpush.msra.mxu0 0.0
    %496 = vmatpush.msra.mxu0 0.0
    %497 = vmatpush.msra.mxu0 0.0
    %498 = vmatpush.msra.mxu0 0.0
    %499 = vmatpush.msra.mxu0 0.0
    %500 = vmatpush.msra.mxu0 0.0
    %501 = vmatpush.msra.mxu0 0.0
    %502 = vmatpush.msra.mxu0 0.0
    %503 = vmatpush.msra.mxu0 %v438
    %504 = vmatpush.msra.mxu0 %v437
    %505 = vmatpush.msra.mxu0 %v436
    %506 = vmatpush.msra.mxu0 %v435
    %507 = vmatpush.msra.mxu0 %v434
    %508 = vmatpush.msra.mxu0 %v433
    %509 = vmatpush.msra.mxu0 %v432
    %510 = vmatpush.msra.mxu0 %v431
    %511 = vmatmul.f32.gmra.mxu0 %v487
    %v512 = vpop.f32.mrf.mxu0
    %v513 = vadd.f32 %v478, %v512
    %514 = vmatmul.f32.gmra.mxu0 %v490
    %v515 = vpop.f32.mrf.mxu0
    %v516 = vadd.f32 %v481, %v515
    %517 = vmatmul.f32.gmra.mxu0 %v493
    %v518 = vpop.f32.mrf.mxu0
    %v519 = vadd.f32 %v484, %v518
    %520 = vdwg.mxu0
    %v521 = vld [vmem:[#allocation2 + $0x2] sm:$0xff]
    %v522 = vld [vmem:[#allocation2 + $0xa] sm:$0xff]
    %v523 = vld [vmem:[#allocation2 + $0x12] sm:$0x3]
    %s524 = scalar_lea.vmem %s2, 128
    %v525 = vld [vmem:[%s524] sm:$0xff]
    %v526 = vld [vmem:[%s524 + $0x8] sm:$0xff]
    %v527 = vld [vmem:[%s524 + $0x10] sm:$0xff]
    %v528 = vld [vmem:[%s524 + $0x18] sm:$0xff]
    %v529 = vld [vmem:[%s524 + $0x20] sm:$0xff]
    %v530 = vld [vmem:[%s524 + $0x28] sm:$0xff]
    %v531 = vld [vmem:[%s524 + $0x30] sm:$0xff]
    %v532 = vld [vmem:[%s524 + $0x38] sm:$0xff]
    %v534 = vsel %vm423, %v521, 0
    %v537 = vsel %vm423, %v522, 0
    %v540 = vsel %vm423, %v523, 0
    %542 = vmatpush.msra.mxu0 0.0
    %543 = vmatpush.msra.mxu0 0.0
    %544 = vmatpush.msra.mxu0 0.0
    %545 = vmatpush.msra.mxu0 0.0
    %546 = vmatpush.msra.mxu0 0.0
    %547 = vmatpush.msra.mxu0 0.0
    %548 = vmatpush.msra.mxu0 0.0
    %549 = vmatpush.msra.mxu0 0.0
    %550 = vmatpush.msra.mxu0 %v532
    %551 = vmatpush.msra.mxu0 %v531
    %552 = vmatpush.msra.mxu0 %v530
    %553 = vmatpush.msra.mxu0 %v529
    %554 = vmatpush.msra.mxu0 %v528
    %555 = vmatpush.msra.mxu0 %v527
    %556 = vmatpush.msra.mxu0 %v526
    %557 = vmatpush.msra.mxu0 %v525
    %558 = vmatmul.f32.gmra.mxu0 %v534
    %v559 = vpop.f32.mrf.mxu0
    %v560 = vadd.f32 0.0, %v559
    %561 = vmatmul.f32.gmra.mxu0 %v537
    %v562 = vpop.f32.mrf.mxu0
    %v563 = vadd.f32 0.0, %v562
    %564 = vmatmul.f32.gmra.mxu0 %v540
    %v565 = vpop.f32.mrf.mxu0
    %v566 = vadd.f32 0.0, %v565
    %567 = vdwg.mxu0
    %v568 = vadd.f32 %v513, %v560
    %v569 = vadd.f32 %v516, %v563
    %v570 = vadd.f32 %v519, %v566
    %v571 = vmax.f32 %v568, 0.0
    %v572 = vmax.f32 %v569, 0.0
    %v573 = vmax.f32 %v570, 0.0
    %v574 = vld [vmem:[%s7] sm:$0xff]
    %v575 = vld [vmem:[%s7 + $0x8] sm:$0xf]
    %vm576 = vcmask 146432
    %v578 = vsel %vm576, %v574, 0
    %v581 = vsel %vm576, %v575, 0
    %v584 = vsel %vm263, %v573, 0
    %586 = vmatpush.msra.mxu0 0.0
    %587 = vmatpush.msra.mxu0 0.0
    %588 = vmatpush.msra.mxu0 0.0
    %589 = vmatpush.msra.mxu0 0.0
    %590 = vmatpush.msra.mxu0 0.0
    %591 = vmatpush.msra.mxu0 0.0
    %592 = vmatpush.msra.mxu0 0.0
    %593 = vmatpush.msra.mxu0 0.0
    %594 = vmatpush.msra.mxu0 0.0
    %595 = vmatpush.msra.mxu0 0.0
    %596 = vmatpush.msra.mxu0 0.0
    %597 = vmatpush.msra.mxu0 0.0
    %598 = vmatpush.msra.mxu0 0.0
    %599 = vmatpush.msra.mxu0 %v584
    %600 = vmatpush.msra.mxu0 %v572
    %601 = vmatpush.msra.mxu0 %v571
    %602 = vmatmul.f32.gmra.mxu0 %v578
    %v603 = vpop.f32.mrf.mxu0
    %v604 = vadd.f32 0.0, %v603
    %605 = vmatmul.f32.gmra.mxu0 %v581
    %v606 = vpop.f32.mrf.mxu0
    %v607 = vadd.f32 0.0, %v606
    %608 = vdwg.mxu0
    %s609 = scalar_lea.vmem %s7, 16
    %v610 = vld [vmem:[%s609] sm:$0xff]
    %v611 = vld [vmem:[%s609 + $0x8] sm:$0xf]
    %v613 = vsel %vm576, %v610, 0
    %v616 = vsel %vm576, %v611, 0
    %618 = vmatpush.msra.mxu0 0.0
    %619 = vmatpush.msra.mxu0 0.0
    %620 = vmatpush.msra.mxu0 0.0
    %621 = vmatpush.msra.mxu0 0.0
    %622 = vmatpush.msra.mxu0 0.0
    %623 = vmatpush.msra.mxu0 0.0
    %624 = vmatpush.msra.mxu0 0.0
    %625 = vmatpush.msra.mxu0 0.0
    %626 = vmatpush.msra.mxu0 0.0
    %627 = vmatpush.msra.mxu0 0.0
    %628 = vmatpush.msra.mxu0 0.0
    %629 = vmatpush.msra.mxu0 0.0
    %630 = vmatpush.msra.mxu0 0.0
    %631 = vmatpush.msra.mxu0 %v584
    %632 = vmatpush.msra.mxu0 %v572
    %633 = vmatpush.msra.mxu0 %v571
    %634 = vmatmul.f32.gmra.mxu0 %v613
    %v635 = vpop.f32.mrf.mxu0
    %v636 = vadd.f32 0.0, %v635
    %637 = vmatmul.f32.gmra.mxu0 %v616
    %v638 = vpop.f32.mrf.mxu0
    %v639 = vadd.f32 0.0, %v638
    %640 = vdwg.mxu0
    %v641 = vmax.f32 %v604, %v636
    %v642 = vmax.f32 %v607, %v639
    %v643 = vld [vmem:[%s11] sm:$0xff]
    %v644 = vld [vmem:[%s11 + $0x8] sm:$0xff]
    %v645 = vld [vmem:[%s11 + $0x10] sm:$0xff]
    %v646 = vld [vmem:[%s11 + $0x18] sm:$0xff]
    %v647 = vld [vmem:[%s11 + $0x20] sm:$0xff]
    %v648 = vld [vmem:[%s11 + $0x28] sm:$0xff]
    %v649 = vld [vmem:[%s11 + $0x30] sm:$0xff]
    %v650 = vld [vmem:[%s11 + $0x38] sm:$0xff]
    %v651 = vld [vmem:[%s11 + $0x40] sm:$0xff]
    %v652 = vld [vmem:[%s11 + $0x48] sm:$0xff]
    %v653 = vld [vmem:[%s11 + $0x50] sm:$0xff]
    %v654 = vld [vmem:[%s11 + $0x58] sm:$0xff]
    %v655 = vld [vmem:[%s11 + $0x60] sm:$0xff]
    %v656 = vld [vmem:[%s11 + $0x68] sm:$0xff]
    %v657 = vld [vmem:[%s11 + $0x70] sm:$0xff]
    %v658 = vld [vmem:[%s11 + $0x78] sm:$0xff]
    %659 = vmatpush.msra.mxu0 %v658
    %660 = vmatpush.msra.mxu0 %v657
    %661 = vmatpush.msra.mxu0 %v656
    %662 = vmatpush.msra.mxu0 %v655
    %663 = vmatpush.msra.mxu0 %v654
    %664 = vmatpush.msra.mxu0 %v653
    %665 = vmatpush.msra.mxu0 %v652
    %666 = vmatpush.msra.mxu0 %v651
    %667 = vmatpush.msra.mxu0 %v650
    %668 = vmatpush.msra.mxu0 %v649
    %669 = vmatpush.msra.mxu0 %v648
    %670 = vmatpush.msra.mxu0 %v647
    %671 = vmatpush.msra.mxu0 %v646
    %672 = vmatpush.msra.mxu0 %v645
    %673 = vmatpush.msra.mxu0 %v644
    %674 = vmatpush.msra.mxu0 %v643
    %675 = vmatmul.f32.gmra.mxu0 %v641
    %v676 = vpop.f32.mrf.mxu0
    %v677 = vadd.f32 0.0, %v676
    %678 = vmatmul.f32.gmra.mxu0 %v642
    %v679 = vpop.f32.mrf.mxu0
    %v680 = vadd.f32 0.0, %v679
    %681 = vdwg.mxu0
    %s682 = scalar_lea.vmem %s11, 128
    %v683 = vld [vmem:[%s682] sm:$0xff]
    %v684 = vld [vmem:[%s682 + $0x8] sm:$0xff]
    %v685 = vld [vmem:[%s682 + $0x10] sm:$0xff]
    %v686 = vld [vmem:[%s682 + $0x18] sm:$0xff]
    %v687 = vld [vmem:[%s682 + $0x20] sm:$0xff]
    %v688 = vld [vmem:[%s682 + $0x28] sm:$0xff]
    %v689 = vld [vmem:[%s682 + $0x30] sm:$0xff]
    %v690 = vld [vmem:[%s682 + $0x38] sm:$0xff]
    %v691 = vld [vmem:[%s682 + $0x40] sm:$0xff]
    %v692 = vld [vmem:[%s682 + $0x48] sm:$0xff]
    %v693 = vld [vmem:[%s682 + $0x50] sm:$0xff]
    %v694 = vld [vmem:[%s682 + $0x58] sm:$0xff]
    %v695 = vld [vmem:[%s682 + $0x60] sm:$0xff]
    %v696 = vld [vmem:[%s682 + $0x68] sm:$0xff]
    %v697 = vld [vmem:[%s682 + $0x70] sm:$0xff]
    %v698 = vld [vmem:[%s682 + $0x78] sm:$0xff]
    %699 = vmatpush.msra.mxu0 %v698
    %700 = vmatpush.msra.mxu0 %v697
    %701 = vmatpush.msra.mxu0 %v696
    %702 = vmatpush.msra.mxu0 %v695
    %703 = vmatpush.msra.mxu0 %v694
    %704 = vmatpush.msra.mxu0 %v693
    %705 = vmatpush.msra.mxu0 %v692
    %706 = vmatpush.msra.mxu0 %v691
    %707 = vmatpush.msra.mxu0 %v690
    %708 = vmatpush.msra.mxu0 %v689
    %709 = vmatpush.msra.mxu0 %v688
    %710 = vmatpush.msra.mxu0 %v687
    %711 = vmatpush.msra.mxu0 %v686
    %712 = vmatpush.msra.mxu0 %v685
    %713 = vmatpush.msra.mxu0 %v684
    %714 = vmatpush.msra.mxu0 %v683
    %715 = vmatmul.f32.gmra.mxu0 %v641
    %v716 = vpop.f32.mrf.mxu0
    %v717 = vadd.f32 0.0, %v716
    %718 = vmatmul.f32.gmra.mxu0 %v642
    %v719 = vpop.f32.mrf.mxu0
    %v720 = vadd.f32 0.0, %v719
    %721 = vdwg.mxu0
    %v722 = vmax.f32 %v677, %v717
    %v723 = vmax.f32 %v680, %v720
    %724 = vst.msk [vmem:[#allocation3] sm:$0xff] %vm423, %v722
    %725 = vst.msk [vmem:[#allocation3 + $0x8] sm:$0xf] %vm426, %v723
    %v726 = vld [vmem:[#allocation3] sm:$0xff]
    %v727 = vld [vmem:[#allocation3 + $0x8] sm:$0x3]
    %v728 = vld [vmem:[%s3] sm:$0xff]
    %v729 = vld [vmem:[%s3 + $0x8] sm:$0xff]
    %v730 = vld [vmem:[%s3 + $0x10] sm:$0xff]
    %v731 = vld [vmem:[%s3 + $0x18] sm:$0xff]
    %v732 = vld [vmem:[%s3 + $0x20] sm:$0xff]
    %v733 = vld [vmem:[%s3 + $0x28] sm:$0xff]
    %v734 = vld [vmem:[%s3 + $0x30] sm:$0xff]
    %v735 = vld [vmem:[%s3 + $0x38] sm:$0xff]
    %v736 = vld [vmem:[#allocation3 + $0x1] sm:$0xff]
    %v737 = vld [vmem:[#allocation3 + $0x9] sm:$0x3]
    %s738 = scalar_lea.vmem %s3, 64
    %v739 = vld [vmem:[%s738] sm:$0xff]
    %v740 = vld [vmem:[%s738 + $0x8] sm:$0xff]
    %v741 = vld [vmem:[%s738 + $0x10] sm:$0xff]
    %v742 = vld [vmem:[%s738 + $0x18] sm:$0xff]
    %v743 = vld [vmem:[%s738 + $0x20] sm:$0xff]
    %v744 = vld [vmem:[%s738 + $0x28] sm:$0xff]
    %v745 = vld [vmem:[%s738 + $0x30] sm:$0xff]
    %v746 = vld [vmem:[%s738 + $0x38] sm:$0xff]
    %v748 = vsel %vm423, %v736, 0
    %v751 = vsel %vm423, %v737, 0
    %753 = vmatpush.msra.mxu0 0.0
    %754 = vmatpush.msra.mxu0 0.0
    %755 = vmatpush.msra.mxu0 0.0
    %756 = vmatpush.msra.mxu0 0.0
    %757 = vmatpush.msra.mxu0 0.0
    %758 = vmatpush.msra.mxu0 0.0
    %759 = vmatpush.msra.mxu0 0.0
    %760 = vmatpush.msra.mxu0 0.0
    %761 = vmatpush.msra.mxu0 %v746
    %762 = vmatpush.msra.mxu0 %v745
    %763 = vmatpush.msra.mxu0 %v744
    %764 = vmatpush.msra.mxu0 %v743
    %765 = vmatpush.msra.mxu0 %v742
    %766 = vmatpush.msra.mxu0 %v741
    %767 = vmatpush.msra.mxu0 %v740
    %768 = vmatpush.msra.mxu0 %v739
    %769 = vmatmul.f32.gmra.mxu0 %v748
    %v770 = vpop.f32.mrf.mxu0
    %v771 = vadd.f32 0.0, %v770
    %772 = vmatmul.f32.gmra.mxu0 %v751
    %v773 = vpop.f32.mrf.mxu0
    %v774 = vadd.f32 0.0, %v773
    %775 = vdwg.mxu0
    %v777 = vsel %vm423, %v726, 0
    %v780 = vsel %vm423, %v727, 0
    %782 = vmatpush.msra.mxu0 0.0
    %783 = vmatpush.msra.mxu0 0.0
    %784 = vmatpush.msra.mxu0 0.0
    %785 = vmatpush.msra.mxu0 0.0
    %786 = vmatpush.msra.mxu0 0.0
    %787 = vmatpush.msra.mxu0 0.0
    %788 = vmatpush.msra.mxu0 0.0
    %789 = vmatpush.msra.mxu0 0.0
    %790 = vmatpush.msra.mxu0 %v735
    %791 = vmatpush.msra.mxu0 %v734
    %792 = vmatpush.msra.mxu0 %v733
    %793 = vmatpush.msra.mxu0 %v732
    %794 = vmatpush.msra.mxu0 %v731
    %795 = vmatpush.msra.mxu0 %v730
    %796 = vmatpush.msra.mxu0 %v729
    %797 = vmatpush.msra.mxu0 %v728
    %798 = vmatmul.f32.gmra.mxu0 %v777
    %v799 = vpop.f32.mrf.mxu0
    %v800 = vadd.f32 %v771, %v799
    %801 = vmatmul.f32.gmra.mxu0 %v780
    %v802 = vpop.f32.mrf.mxu0
    %v803 = vadd.f32 %v774, %v802
    %804 = vdwg.mxu0
    %v805 = vld [vmem:[#allocation3 + $0x2] sm:$0xff]
    %v806 = vld [vmem:[#allocation3 + $0xa] sm:$0x3]
    %s807 = scalar_lea.vmem %s3, 128
    %v808 = vld [vmem:[%s807] sm:$0xff]
    %v809 = vld [vmem:[%s807 + $0x8] sm:$0xff]
    %v810 = vld [vmem:[%s807 + $0x10] sm:$0xff]
    %v811 = vld [vmem:[%s807 + $0x18] sm:$0xff]
    %v812 = vld [vmem:[%s807 + $0x20] sm:$0xff]
    %v813 = vld [vmem:[%s807 + $0x28] sm:$0xff]
    %v814 = vld [vmem:[%s807 + $0x30] sm:$0xff]
    %v815 = vld [vmem:[%s807 + $0x38] sm:$0xff]
    %v817 = vsel %vm423, %v805, 0
    %v820 = vsel %vm423, %v806, 0
    %822 = vmatpush.msra.mxu0 0.0
    %823 = vmatpush.msra.mxu0 0.0
    %824 = vmatpush.msra.mxu0 0.0
    %825 = vmatpush.msra.mxu0 0.0
    %826 = vmatpush.msra.mxu0 0.0
    %827 = vmatpush.msra.mxu0 0.0
    %828 = vmatpush.msra.mxu0 0.0
    %829 = vmatpush.msra.mxu0 0.0
    %830 = vmatpush.msra.mxu0 %v815
    %831 = vmatpush.msra.mxu0 %v814
    %832 = vmatpush.msra.mxu0 %v813
    %833 = vmatpush.msra.mxu0 %v812
    %834 = vmatpush.msra.mxu0 %v811
    %835 = vmatpush.msra.mxu0 %v810
    %836 = vmatpush.msra.mxu0 %v809
    %837 = vmatpush.msra.mxu0 %v808
    %838 = vmatmul.f32.gmra.mxu0 %v817
    %v839 = vpop.f32.mrf.mxu0
    %v840 = vadd.f32 0.0, %v839
    %841 = vmatmul.f32.gmra.mxu0 %v820
    %v842 = vpop.f32.mrf.mxu0
    %v843 = vadd.f32 0.0, %v842
    %844 = vdwg.mxu0
    %v845 = vadd.f32 %v800, %v840
    %v846 = vadd.f32 %v803, %v843
    %v847 = vmax.f32 %v845, 0.0
    %v848 = vmax.f32 %v846, 0.0
    %v849 = vld [vmem:[%s8] sm:$0xff]
    %vm850 = vcmask 80896
    %v852 = vsel %vm850, %v849, 0
    %v855 = vsel %vm263, %v848, 0
    %857 = vmatpush.msra.mxu0 0.0
    %858 = vmatpush.msra.mxu0 0.0
    %859 = vmatpush.msra.mxu0 0.0
    %860 = vmatpush.msra.mxu0 0.0
    %861 = vmatpush.msra.mxu0 0.0
    %862 = vmatpush.msra.mxu0 0.0
    %863 = vmatpush.msra.mxu0 0.0
    %864 = vmatpush.msra.mxu0 0.0
    %865 = vmatpush.msra.mxu0 0.0
    %866 = vmatpush.msra.mxu0 0.0
    %867 = vmatpush.msra.mxu0 0.0
    %868 = vmatpush.msra.mxu0 0.0
    %869 = vmatpush.msra.mxu0 0.0
    %870 = vmatpush.msra.mxu0 0.0
    %871 = vmatpush.msra.mxu0 %v855
    %872 = vmatpush.msra.mxu0 %v847
    %873 = vmatmul.f32.gmra.mxu0 %v852
    %v874 = vpop.f32.mrf.mxu0
    %v875 = vadd.f32 0.0, %v874
    %876 = vdwg.mxu0
    %s877 = scalar_lea.vmem %s8, 8
    %v878 = vld [vmem:[%s877] sm:$0xff]
    %v880 = vsel %vm850, %v878, 0
    %882 = vmatpush.msra.mxu0 0.0
    %883 = vmatpush.msra.mxu0 0.0
    %884 = vmatpush.msra.mxu0 0.0
    %885 = vmatpush.msra.mxu0 0.0
    %886 = vmatpush.msra.mxu0 0.0
    %887 = vmatpush.msra.mxu0 0.0
    %888 = vmatpush.msra.mxu0 0.0
    %889 = vmatpush.msra.mxu0 0.0
    %890 = vmatpush.msra.mxu0 0.0
    %891 = vmatpush.msra.mxu0 0.0
    %892 = vmatpush.msra.mxu0 0.0
    %893 = vmatpush.msra.mxu0 0.0
    %894 = vmatpush.msra.mxu0 0.0
    %895 = vmatpush.msra.mxu0 0.0
    %896 = vmatpush.msra.mxu0 %v855
    %897 = vmatpush.msra.mxu0 %v847
    %898 = vmatmul.f32.gmra.mxu0 %v880
    %v899 = vpop.f32.mrf.mxu0
    %v900 = vadd.f32 0.0, %v899
    %901 = vdwg.mxu0
    %v902 = vmax.f32 %v875, %v900
    %v903 = vld [vmem:[%s12] sm:$0xff]
    %v904 = vld [vmem:[%s12 + $0x8] sm:$0xff]
    %v905 = vld [vmem:[%s12 + $0x10] sm:$0xff]
    %v906 = vld [vmem:[%s12 + $0x18] sm:$0xff]
    %v907 = vld [vmem:[%s12 + $0x20] sm:$0xff]
    %v908 = vld [vmem:[%s12 + $0x28] sm:$0xff]
    %v909 = vld [vmem:[%s12 + $0x30] sm:$0xff]
    %v910 = vld [vmem:[%s12 + $0x38] sm:$0xff]
    %v912 = vsel %vm423, %v902, 0
    %914 = vmatpush.msra.mxu0 0.0
    %915 = vmatpush.msra.mxu0 0.0
    %916 = vmatpush.msra.mxu0 0.0
    %917 = vmatpush.msra.mxu0 0.0
    %918 = vmatpush.msra.mxu0 0.0
    %919 = vmatpush.msra.mxu0 0.0
    %920 = vmatpush.msra.mxu0 0.0
    %921 = vmatpush.msra.mxu0 0.0
    %922 = vmatpush.msra.mxu0 %v910
    %923 = vmatpush.msra.mxu0 %v909
    %924 = vmatpush.msra.mxu0 %v908
    %925 = vmatpush.msra.mxu0 %v907
    %926 = vmatpush.msra.mxu0 %v906
    %927 = vmatpush.msra.mxu0 %v905
    %928 = vmatpush.msra.mxu0 %v904
    %929 = vmatpush.msra.mxu0 %v903
    %930 = vmatmul.f32.gmra.mxu0 %v912
    %v931 = vpop.f32.mrf.mxu0
    %v932 = vadd.f32 0.0, %v931
    %933 = vdwg.mxu0
    %s934 = scalar_lea.vmem %s12, 64
    %v935 = vld [vmem:[%s934] sm:$0xff]
    %v936 = vld [vmem:[%s934 + $0x8] sm:$0xff]
    %v937 = vld [vmem:[%s934 + $0x10] sm:$0xff]
    %v938 = vld [vmem:[%s934 + $0x18] sm:$0xff]
    %v939 = vld [vmem:[%s934 + $0x20] sm:$0xff]
    %v940 = vld [vmem:[%s934 + $0x28] sm:$0xff]
    %v941 = vld [vmem:[%s934 + $0x30] sm:$0xff]
    %v942 = vld [vmem:[%s934 + $0x38] sm:$0xff]
    %943 = vmatpush.msra.mxu0 0.0
    %944 = vmatpush.msra.mxu0 0.0
    %945 = vmatpush.msra.mxu0 0.0
    %946 = vmatpush.msra.mxu0 0.0
    %947 = vmatpush.msra.mxu0 0.0
    %948 = vmatpush.msra.mxu0 0.0
    %949 = vmatpush.msra.mxu0 0.0
    %950 = vmatpush.msra.mxu0 0.0
    %951 = vmatpush.msra.mxu0 %v942
    %952 = vmatpush.msra.mxu0 %v941
    %953 = vmatpush.msra.mxu0 %v940
    %954 = vmatpush.msra.mxu0 %v939
    %955 = vmatpush.msra.mxu0 %v938
    %956 = vmatpush.msra.mxu0 %v937
    %957 = vmatpush.msra.mxu0 %v936
    %958 = vmatpush.msra.mxu0 %v935
    %959 = vmatmul.f32.gmra.mxu0 %v912
    %v960 = vpop.f32.mrf.mxu0
    %v961 = vadd.f32 0.0, %v960
    %962 = vdwg.mxu0
    %v963 = vmax.f32 %v932, %v961
    %vm964 = vcmask 261120
    %965 = vst.msk [vmem:[#allocation4] sm:$0xff] %vm964, %v963
    %v966 = vld [vmem:[#allocation4] sm:$0x3f]
    %v967 = vld [vmem:[%s4] sm:$0xff]
    %v968 = vld [vmem:[%s4 + $0x8] sm:$0xff]
    %v969 = vld [vmem:[%s4 + $0x10] sm:$0xff]
    %v970 = vld [vmem:[%s4 + $0x18] sm:$0xff]
    %v971 = vld [vmem:[#allocation4 + $0x1] sm:$0x3f]
    %s972 = scalar_lea.vmem %s4, 32
    %v973 = vld [vmem:[%s972] sm:$0xff]
    %v974 = vld [vmem:[%s972 + $0x8] sm:$0xff]
    %v975 = vld [vmem:[%s972 + $0x10] sm:$0xff]
    %v976 = vld [vmem:[%s972 + $0x18] sm:$0xff]
    %v978 = vsel %vm964, %v971, 0
    %980 = vmatpush.msra.mxu0 0.0
    %981 = vmatpush.msra.mxu0 0.0
    %982 = vmatpush.msra.mxu0 0.0
    %983 = vmatpush.msra.mxu0 0.0
    %984 = vmatpush.msra.mxu0 0.0
    %985 = vmatpush.msra.mxu0 0.0
    %986 = vmatpush.msra.mxu0 0.0
    %987 = vmatpush.msra.mxu0 0.0
    %988 = vmatpush.msra.mxu0 0.0
    %989 = vmatpush.msra.mxu0 0.0
    %990 = vmatpush.msra.mxu0 0.0
    %991 = vmatpush.msra.mxu0 0.0
    %992 = vmatpush.msra.mxu0 %v976
    %993 = vmatpush.msra.mxu0 %v975
    %994 = vmatpush.msra.mxu0 %v974
    %995 = vmatpush.msra.mxu0 %v973
    %996 = vmatmul.f32.gmra.mxu0 %v978
    %v997 = vpop.f32.mrf.mxu0
    %v998 = vadd.f32 0.0, %v997
    %999 = vdwg.mxu0
    %v1001 = vsel %vm964, %v966, 0
    %1003 = vmatpush.msra.mxu0 0.0
    %1004 = vmatpush.msra.mxu0 0.0
    %1005 = vmatpush.msra.mxu0 0.0
    %1006 = vmatpush.msra.mxu0 0.0
    %1007 = vmatpush.msra.mxu0 0.0
    %1008 = vmatpush.msra.mxu0 0.0
    %1009 = vmatpush.msra.mxu0 0.0
    %1010 = vmatpush.msra.mxu0 0.0
    %1011 = vmatpush.msra.mxu0 0.0
    %1012 = vmatpush.msra.mxu0 0.0
    %1013 = vmatpush.msra.mxu0 0.0
    %1014 = vmatpush.msra.mxu0 0.0
    %1015 = vmatpush.msra.mxu0 %v970
    %1016 = vmatpush.msra.mxu0 %v969
    %1017 = vmatpush.msra.mxu0 %v968
    %1018 = vmatpush.msra.mxu0 %v967
    %1019 = vmatmul.f32.gmra.mxu0 %v1001
    %v1020 = vpop.f32.mrf.mxu0
    %v1021 = vadd.f32 %v998, %v1020
    %1022 = vdwg.mxu0
    %v1023 = vld [vmem:[#allocation4 + $0x2] sm:$0x3f]
    %s1024 = scalar_lea.vmem %s4, 64
    %v1025 = vld [vmem:[%s1024] sm:$0xff]
    %v1026 = vld [vmem:[%s1024 + $0x8] sm:$0xff]
    %v1027 = vld [vmem:[%s1024 + $0x10] sm:$0xff]
    %v1028 = vld [vmem:[%s1024 + $0x18] sm:$0xff]
    %v1030 = vsel %vm964, %v1023, 0
    %1032 = vmatpush.msra.mxu0 0.0
    %1033 = vmatpush.msra.mxu0 0.0
    %1034 = vmatpush.msra.mxu0 0.0
    %1035 = vmatpush.msra.mxu0 0.0
    %1036 = vmatpush.msra.mxu0 0.0
    %1037 = vmatpush.msra.mxu0 0.0
    %1038 = vmatpush.msra.mxu0 0.0
    %1039 = vmatpush.msra.mxu0 0.0
    %1040 = vmatpush.msra.mxu0 0.0
    %1041 = vmatpush.msra.mxu0 0.0
    %1042 = vmatpush.msra.mxu0 0.0
    %1043 = vmatpush.msra.mxu0 0.0
    %1044 = vmatpush.msra.mxu0 %v1028
    %1045 = vmatpush.msra.mxu0 %v1027
    %1046 = vmatpush.msra.mxu0 %v1026
    %1047 = vmatpush.msra.mxu0 %v1025
    %1048 = vmatmul.f32.gmra.mxu0 %v1030
    %v1049 = vpop.f32.mrf.mxu0
    %v1050 = vadd.f32 0.0, %v1049
    %1051 = vdwg.mxu0
    %v1052 = vadd.f32 %v1021, %v1050
    %v1053 = vmax.f32 %v1052, 0.0
    %v1054 = vld [vmem:[%s9] sm:$0x3f]
    %vm1055 = vcmask 48128
    %v1057 = vsel %vm1055, %v1054, 0
    %vm1059 = vcmask 1045504
    %v1061 = vsel %vm1059, %v1053, 0
    %1063 = vmatpush.msra.mxu0 0.0
    %1064 = vmatpush.msra.mxu0 0.0
    %1065 = vmatpush.msra.mxu0 0.0
    %1066 = vmatpush.msra.mxu0 0.0
    %1067 = vmatpush.msra.mxu0 0.0
    %1068 = vmatpush.msra.mxu0 0.0
    %1069 = vmatpush.msra.mxu0 0.0
    %1070 = vmatpush.msra.mxu0 0.0
    %1071 = vmatpush.msra.mxu0 0.0
    %1072 = vmatpush.msra.mxu0 0.0
    %1073 = vmatpush.msra.mxu0 0.0
    %1074 = vmatpush.msra.mxu0 0.0
    %1075 = vmatpush.msra.mxu0 0.0
    %1076 = vmatpush.msra.mxu0 0.0
    %1077 = vmatpush.msra.mxu0 0.0
    %1078 = vmatpush.msra.mxu0 %v1061
    %1079 = vmatmul.f32.gmra.mxu0 %v1057
    %v1080 = vpop.f32.mrf.mxu0
    %v1081 = vadd.f32 0.0, %v1080
    %1082 = vdwg.mxu0
    %s1083 = scalar_lea.vmem %s9, 8
    %v1084 = vld [vmem:[%s1083] sm:$0x3f]
    %v1086 = vsel %vm1055, %v1084, 0
    %1088 = vmatpush.msra.mxu0 0.0
    %1089 = vmatpush.msra.mxu0 0.0
    %1090 = vmatpush.msra.mxu0 0.0
    %1091 = vmatpush.msra.mxu0 0.0
    %1092 = vmatpush.msra.mxu0 0.0
    %1093 = vmatpush.msra.mxu0 0.0
    %1094 = vmatpush.msra.mxu0 0.0
    %1095 = vmatpush.msra.mxu0 0.0
    %1096 = vmatpush.msra.mxu0 0.0
    %1097 = vmatpush.msra.mxu0 0.0
    %1098 = vmatpush.msra.mxu0 0.0
    %1099 = vmatpush.msra.mxu0 0.0
    %1100 = vmatpush.msra.mxu0 0.0
    %1101 = vmatpush.msra.mxu0 0.0
    %1102 = vmatpush.msra.mxu0 0.0
    %1103 = vmatpush.msra.mxu0 %v1061
    %1104 = vmatmul.f32.gmra.mxu0 %v1086
    %v1105 = vpop.f32.mrf.mxu0
    %v1106 = vadd.f32 0.0, %v1105
    %1107 = vdwg.mxu0
    %v1108 = vmax.f32 %v1081, %v1106
    %v1109 = vld [vmem:[%s13] sm:$0xff]
    %v1110 = vld [vmem:[%s13 + $0x8] sm:$0xff]
    %v1111 = vld [vmem:[%s13 + $0x10] sm:$0xff]
    %v1112 = vld [vmem:[%s13 + $0x18] sm:$0xff]
    %v1113 = vld [vmem:[%s13 + $0x20] sm:$0xff]
    %v1114 = vld [vmem:[%s13 + $0x28] sm:$0xff]
    %v1115 = vld [vmem:[%s13 + $0x30] sm:$0xff]
    %v1116 = vld [vmem:[%s13 + $0x38] sm:$0xff]
    %v1118 = vsel %vm423, %v1108, 0
    %1120 = vmatpush.msra.mxu0 0.0
    %1121 = vmatpush.msra.mxu0 0.0
    %1122 = vmatpush.msra.mxu0 0.0
    %1123 = vmatpush.msra.mxu0 0.0
    %1124 = vmatpush.msra.mxu0 0.0
    %1125 = vmatpush.msra.mxu0 0.0
    %1126 = vmatpush.msra.mxu0 0.0
    %1127 = vmatpush.msra.mxu0 0.0
    %1128 = vmatpush.msra.mxu0 %v1116
    %1129 = vmatpush.msra.mxu0 %v1115
    %1130 = vmatpush.msra.mxu0 %v1114
    %1131 = vmatpush.msra.mxu0 %v1113
    %1132 = vmatpush.msra.mxu0 %v1112
    %1133 = vmatpush.msra.mxu0 %v1111
    %1134 = vmatpush.msra.mxu0 %v1110
    %1135 = vmatpush.msra.mxu0 %v1109
    %1136 = vmatmul.f32.gmra.mxu0 %v1118
    %v1137 = vpop.f32.mrf.mxu0
    %v1138 = vadd.f32 0.0, %v1137
    %1139 = vdwg.mxu0
    %s1140 = scalar_lea.vmem %s13, 64
    %v1141 = vld [vmem:[%s1140] sm:$0xff]
    %v1142 = vld [vmem:[%s1140 + $0x8] sm:$0xff]
    %v1143 = vld [vmem:[%s1140 + $0x10] sm:$0xff]
    %v1144 = vld [vmem:[%s1140 + $0x18] sm:$0xff]
    %v1145 = vld [vmem:[%s1140 + $0x20] sm:$0xff]
    %v1146 = vld [vmem:[%s1140 + $0x28] sm:$0xff]
    %v1147 = vld [vmem:[%s1140 + $0x30] sm:$0xff]
    %v1148 = vld [vmem:[%s1140 + $0x38] sm:$0xff]
    %1149 = vmatpush.msra.mxu0 0.0
    %1150 = vmatpush.msra.mxu0 0.0
    %1151 = vmatpush.msra.mxu0 0.0
    %1152 = vmatpush.msra.mxu0 0.0
    %1153 = vmatpush.msra.mxu0 0.0
    %1154 = vmatpush.msra.mxu0 0.0
    %1155 = vmatpush.msra.mxu0 0.0
    %1156 = vmatpush.msra.mxu0 0.0
    %1157 = vmatpush.msra.mxu0 %v1148
    %1158 = vmatpush.msra.mxu0 %v1147
    %1159 = vmatpush.msra.mxu0 %v1146
    %1160 = vmatpush.msra.mxu0 %v1145
    %1161 = vmatpush.msra.mxu0 %v1144
    %1162 = vmatpush.msra.mxu0 %v1143
    %1163 = vmatpush.msra.mxu0 %v1142
    %1164 = vmatpush.msra.mxu0 %v1141
    %1165 = vmatmul.f32.gmra.mxu0 %v1118
    %v1166 = vpop.f32.mrf.mxu0
    %v1167 = vadd.f32 0.0, %v1166
    %1168 = vdwg.mxu0
    %v1169 = vmax.f32 %v1138, %v1167
    %vm1170 = vcmask 259072
    %1171 = vst.msk [vmem:[#allocation5] sm:$0x3f] %vm1170, %v1169
    %v1172 = vld [vmem:[#allocation5] sm:$0xf]
    %v1173 = vld [vmem:[%s5] sm:$0xff]
    %v1174 = vld [vmem:[%s5 + $0x8] sm:$0xff]
    %v1175 = vld [vmem:[%s5 + $0x10] sm:$0xff]
    %v1176 = vld [vmem:[%s5 + $0x18] sm:$0xff]
    %v1177 = vld [vmem:[#allocation5 + $0x1] sm:$0xf]
    %s1178 = scalar_lea.vmem %s5, 32
    %v1179 = vld [vmem:[%s1178] sm:$0xff]
    %v1180 = vld [vmem:[%s1178 + $0x8] sm:$0xff]
    %v1181 = vld [vmem:[%s1178 + $0x10] sm:$0xff]
    %v1182 = vld [vmem:[%s1178 + $0x18] sm:$0xff]
    %v1184 = vsel %vm964, %v1177, 0
    %1186 = vmatpush.msra.mxu0 0.0
    %1187 = vmatpush.msra.mxu0 0.0
    %1188 = vmatpush.msra.mxu0 0.0
    %1189 = vmatpush.msra.mxu0 0.0
    %1190 = vmatpush.msra.mxu0 0.0
    %1191 = vmatpush.msra.mxu0 0.0
    %1192 = vmatpush.msra.mxu0 0.0
    %1193 = vmatpush.msra.mxu0 0.0
    %1194 = vmatpush.msra.mxu0 0.0
    %1195 = vmatpush.msra.mxu0 0.0
    %1196 = vmatpush.msra.mxu0 0.0
    %1197 = vmatpush.msra.mxu0 0.0
    %1198 = vmatpush.msra.mxu0 %v1182
    %1199 = vmatpush.msra.mxu0 %v1181
    %1200 = vmatpush.msra.mxu0 %v1180
    %1201 = vmatpush.msra.mxu0 %v1179
    %1202 = vmatmul.f32.gmra.mxu0 %v1184
    %v1203 = vpop.f32.mrf.mxu0
    %v1204 = vadd.f32 0.0, %v1203
    %1205 = vdwg.mxu0
    %v1207 = vsel %vm964, %v1172, 0
    %1209 = vmatpush.msra.mxu0 0.0
    %1210 = vmatpush.msra.mxu0 0.0
    %1211 = vmatpush.msra.mxu0 0.0
    %1212 = vmatpush.msra.mxu0 0.0
    %1213 = vmatpush.msra.mxu0 0.0
    %1214 = vmatpush.msra.mxu0 0.0
    %1215 = vmatpush.msra.mxu0 0.0
    %1216 = vmatpush.msra.mxu0 0.0
    %1217 = vmatpush.msra.mxu0 0.0
    %1218 = vmatpush.msra.mxu0 0.0
    %1219 = vmatpush.msra.mxu0 0.0
    %1220 = vmatpush.msra.mxu0 0.0
    %1221 = vmatpush.msra.mxu0 %v1176
    %1222 = vmatpush.msra.mxu0 %v1175
    %1223 = vmatpush.msra.mxu0 %v1174
    %1224 = vmatpush.msra.mxu0 %v1173
    %1225 = vmatmul.f32.gmra.mxu0 %v1207
    %v1226 = vpop.f32.mrf.mxu0
    %v1227 = vadd.f32 %v1204, %v1226
    %1228 = vdwg.mxu0
    %v1229 = vld [vmem:[#allocation5 + $0x2] sm:$0xf]
    %s1230 = scalar_lea.vmem %s5, 64
    %v1231 = vld [vmem:[%s1230] sm:$0xff]
    %v1232 = vld [vmem:[%s1230 + $0x8] sm:$0xff]
    %v1233 = vld [vmem:[%s1230 + $0x10] sm:$0xff]
    %v1234 = vld [vmem:[%s1230 + $0x18] sm:$0xff]
    %v1236 = vsel %vm964, %v1229, 0
    %1238 = vmatpush.msra.mxu0 0.0
    %1239 = vmatpush.msra.mxu0 0.0
    %1240 = vmatpush.msra.mxu0 0.0
    %1241 = vmatpush.msra.mxu0 0.0
    %1242 = vmatpush.msra.mxu0 0.0
    %1243 = vmatpush.msra.mxu0 0.0
    %1244 = vmatpush.msra.mxu0 0.0
    %1245 = vmatpush.msra.mxu0 0.0
    %1246 = vmatpush.msra.mxu0 0.0
    %1247 = vmatpush.msra.mxu0 0.0
    %1248 = vmatpush.msra.mxu0 0.0
    %1249 = vmatpush.msra.mxu0 0.0
    %1250 = vmatpush.msra.mxu0 %v1234
    %1251 = vmatpush.msra.mxu0 %v1233
    %1252 = vmatpush.msra.mxu0 %v1232
    %1253 = vmatpush.msra.mxu0 %v1231
    %1254 = vmatmul.f32.gmra.mxu0 %v1236
    %v1255 = vpop.f32.mrf.mxu0
    %v1256 = vadd.f32 0.0, %v1255
    %1257 = vdwg.mxu0
    %v1258 = vadd.f32 %v1227, %v1256
    %v1259 = vmax.f32 %v1258, 0.0
    %v1260 = vld [vmem:[%s15] sm:$0xff]
    %v1261 = vld [vmem:[%s15 + $0x8] sm:$0xff]
    %v1262 = vld [vmem:[%s15 + $0x10] sm:$0xff]
    %v1263 = vld [vmem:[%s15 + $0x18] sm:$0xff]
    %v1264 = vld [vmem:[%s14] sm:$0x3]
    %vm1265 = vcmask 31744
    %v1267 = vsel %vm1265, %v1264, 0
    %vm1269 = vcmask 1043456
    %v1271 = vsel %vm1269, %v1259, 0
    %1273 = vmatpush.msra.mxu0 0.0
    %1274 = vmatpush.msra.mxu0 0.0
    %1275 = vmatpush.msra.mxu0 0.0
    %1276 = vmatpush.msra.mxu0 0.0
    %1277 = vmatpush.msra.mxu0 0.0
    %1278 = vmatpush.msra.mxu0 0.0
    %1279 = vmatpush.msra.mxu0 0.0
    %1280 = vmatpush.msra.mxu0 0.0
    %1281 = vmatpush.msra.mxu0 0.0
    %1282 = vmatpush.msra.mxu0 0.0
    %1283 = vmatpush.msra.mxu0 0.0
    %1284 = vmatpush.msra.mxu0 0.0
    %1285 = vmatpush.msra.mxu0 0.0
    %1286 = vmatpush.msra.mxu0 0.0
    %1287 = vmatpush.msra.mxu0 0.0
    %1288 = vmatpush.msra.mxu0 %v1271
    %1289 = vmatmul.f32.gmra.mxu0 %v1267
    %v1290 = vpop.f32.mrf.mxu0
    %v1291 = vadd.f32 0.0, %v1290
    %1292 = vdwg.mxu0
    %v1293 = vld [vmem:[%s16] sm:$0x1]
    %v1295 = vperm.slane %v1293, 0
    %v1298 = vsel %vm964, %v1291, 0
    %1300 = vmatpush.msra.mxu0 0.0
    %1301 = vmatpush.msra.mxu0 0.0
    %1302 = vmatpush.msra.mxu0 0.0
    %1303 = vmatpush.msra.mxu0 0.0
    %1304 = vmatpush.msra.mxu0 0.0
    %1305 = vmatpush.msra.mxu0 0.0
    %1306 = vmatpush.msra.mxu0 0.0
    %1307 = vmatpush.msra.mxu0 0.0
    %1308 = vmatpush.msra.mxu0 0.0
    %1309 = vmatpush.msra.mxu0 0.0
    %1310 = vmatpush.msra.mxu0 0.0
    %1311 = vmatpush.msra.mxu0 0.0
    %1312 = vmatpush.msra.mxu0 %v1263
    %1313 = vmatpush.msra.mxu0 %v1262
    %1314 = vmatpush.msra.mxu0 %v1261
    %1315 = vmatpush.msra.mxu0 %v1260
    %1316 = vmatmul.f32.gmra.mxu0 %v1298
    %v1317 = vpop.f32.mrf.mxu0
    %v1318 = vadd.f32 %v1295, %v1317
    %1319 = vdwg.mxu0
    %v1320 = vmax.f32 %v1318, 0.0
    %v1321 = vld [vmem:[%s17] sm:$0xff]
    %v1322 = vld [vmem:[%s17 + $0x8] sm:$0xff]
    %v1323 = vld [vmem:[%s17 + $0x10] sm:$0xff]
    %v1324 = vld [vmem:[%s17 + $0x18] sm:$0xff]
    %v1325 = vld [vmem:[%s17 + $0x20] sm:$0xff]
    %v1326 = vld [vmem:[%s17 + $0x28] sm:$0xff]
    %v1327 = vld [vmem:[%s17 + $0x30] sm:$0xff]
    %v1328 = vld [vmem:[%s17 + $0x38] sm:$0xff]
    %v1329 = vld [vmem:[%s18] sm:$0x1]
    %v1331 = vperm.slane %v1329, 0
    %v1334 = vsel %vm423, %v1320, 0
    %1336 = vmatpush.msra.mxu0 0.0
    %1337 = vmatpush.msra.mxu0 0.0
    %1338 = vmatpush.msra.mxu0 0.0
    %1339 = vmatpush.msra.mxu0 0.0
    %1340 = vmatpush.msra.mxu0 0.0
    %1341 = vmatpush.msra.mxu0 0.0
    %1342 = vmatpush.msra.mxu0 0.0
    %1343 = vmatpush.msra.mxu0 0.0
    %1344 = vmatpush.msra.mxu0 %v1328
    %1345 = vmatpush.msra.mxu0 %v1327
    %1346 = vmatpush.msra.mxu0 %v1326
    %1347 = vmatpush.msra.mxu0 %v1325
    %1348 = vmatpush.msra.mxu0 %v1324
    %1349 = vmatpush.msra.mxu0 %v1323
    %1350 = vmatpush.msra.mxu0 %v1322
    %1351 = vmatpush.msra.mxu0 %v1321
    %1352 = vmatmul.f32.gmra.mxu0 %v1334
    %v1353 = vpop.f32.mrf.mxu0
    %v1354 = vadd.f32 %v1331, %v1353
    %1355 = vdwg.mxu0
    %1356 = vst [vmem:[#allocation6] sm:$0x3] %v1354
    // Predicated region
    $region78: #{tpu_custom_call.1} parent=1 // pred_check
      _
    $region79: #{tpu_custom_call.1} parent=1 // pred_check_branch
      %1358 = sbr.rel (0) target = $region81
    $region80: #{tpu_custom_call.1} parent=1 // pred_region
      %1360 = vsyncadd [#allocation7], 0
      %s1362 = sshll.u32 [#allocation6], 4
      %s1363 = int_to_ptr.vmem [resolvable:$true] %s1362
      %s1364 = sshll.u32 %s19, 4
      %s1365 = int_to_ptr.hbm [resolvable:$true] %s1364
      %1367 = dma.vmem_to_hbm [thread:$0]  %s1363, 32, %s1365, [#allocation7]
    $region81: #{tpu_custom_call.1} parent=1 // pred_fallthru
      _
    // Predicated region
    $region82: #{tpu_custom_call.1} parent=1 // pred_check
      _
    $region83: #{tpu_custom_call.1} parent=1 // pred_check_branch
      %1369 = sbr.rel (0) target = $region85
    $region84: #{tpu_custom_call.1} parent=1 // pred_region
      %1371 = dma.done [#allocation7], 32
    $region85: #{tpu_custom_call.1} parent=1 // pred_fallthru
      _
    %1372 = vsyncpa [#allocation7], 1

</llo_original>
